<compile_context>
chip_gen: v5e
topology: v5e:2x2
jax: 0.10.0
libtpu: 0.0.40
codegen_flags: <defaults>
</compile_context>

<pallas_src>
import numpy as np
import jax
import jax.numpy as jnp
from jax import lax
from jax.experimental import pallas as pl
from jax.experimental.pallas import tpu as pltpu  # noqa: F401  (TPU-specific tuning hooks)

LN_EPS = 1e-5


def _ln(x, gamma, beta):
    mu = jnp.mean(x, axis=-1, keepdims=True)
    var = jnp.mean((x - mu) ** 2, axis=-1, keepdims=True)
    return (x - mu) * lax.rsqrt(var + LN_EPS) * gamma + beta


# ------------------------- parameter slab layout & packing -------------------------
def _slab_layout(D, F, H):
    """Row/col offsets of each weight block inside the packed bf16 slab.
    Every block starts at a 16-row boundary (bf16 sublane tile) so all loads are aligned."""
    Dh = D // H
    r16 = lambda n: ((n + 15) // 16) * 16
    row_qkv = 0
    row_wo = r16(D)
    wo_stride = r16(Dh)
    row_w1 = row_wo + H * wo_stride
    row_w2 = row_w1 + r16(D)
    rows = row_w2 + r16(F)
    cols = max(3 * D, F, D)
    return dict(row_qkv=row_qkv, row_wo=row_wo, wo_stride=wo_stride,
                row_w1=row_w1, row_w2=row_w2, rows=rows, cols=cols)


def _pack_params(layer_params, D, F, H):
    """Pack all matmul weights into one bf16 slab and all biases/LN params into one f32 slab.
    Also folds 1/sqrt(Dh) into the q columns of wqkv and bqkv."""
    L = len(layer_params)
    Dh = D // H
    lay = _slab_layout(D, F, H)
    scale = 1.0 / float(np.sqrt(Dh))

    w = np.zeros((L, lay["rows"], lay["cols"]), np.float32)
    p = np.zeros((L, 8, lay["cols"]), np.float32)
    for i, lp in enumerate(layer_params):
        wqkv = np.array(lp["wqkv"], np.float32)
        bqkv = np.array(lp["bqkv"], np.float32)
        wqkv[:, :D] *= scale            # fold 1/sqrt(Dh) into q projection
        bqkv[:, :D] *= scale
        w[i, 0:D, 0:3 * D] = wqkv
        wo = np.array(lp["wo"], np.float32)
        for h in range(H):
            r = lay["row_wo"] + h * lay["wo_stride"]
            w[i, r:r + Dh, 0:D] = wo[h * Dh:(h + 1) * Dh, :]
        w[i, lay["row_w1"]:lay["row_w1"] + D, 0:F] = np.array(lp["w1"], np.float32)
        w[i, lay["row_w2"]:lay["row_w2"] + F, 0:D] = np.array(lp["w2"], np.float32)

        p[i, 0, 0:3 * D] = bqkv[0]
        p[i, 1, 0:D] = np.array(lp["bo"], np.float32)[0]
        p[i, 2, 0:F] = np.array(lp["b1"], np.float32)[0]
        p[i, 3, 0:D] = np.array(lp["b2"], np.float32)[0]
        p[i, 4, 0:D] = np.array(lp["g1"], np.float32)[0]
        p[i, 5, 0:D] = np.array(lp["be1"], np.float32)[0]
        p[i, 6, 0:D] = np.array(lp["g2"], np.float32)[0]
        p[i, 7, 0:D] = np.array(lp["be2"], np.float32)[0]
    return jnp.asarray(w, jnp.bfloat16), jnp.asarray(p, jnp.float32)


# ---------------------- Pallas kernel (all layers, whole batch, fused) ----------------------
def _make_fused_encoder_kernel(L, B, S, D, H, F, lay):
    Dh = D // H
    bf16 = jnp.bfloat16
    row_wo, wo_stride = lay["row_wo"], lay["wo_stride"]
    row_w1, row_w2 = lay["row_w1"], lay["row_w2"]

    def kernel(x_ref, mask_ref, w_ref, p_ref, o_ref):
        x = x_ref[...]                       # (B*S, D) f32 residual stream
        mask = mask_ref[...]                 # (B, S, S) f32 additive mask, loaded once

        for layer in range(L):               # static unroll (L = 2)
            # ---- packed weight / bias slabs, static aligned slices ----
            wqkv = w_ref[layer, 0:D, 0:3 * D]                # (D, 3D) bf16, q cols pre-scaled
            w1 = w_ref[layer, row_w1:row_w1 + D, 0:F]        # (D, F)  bf16
            w2 = w_ref[layer, row_w2:row_w2 + F, 0:D]        # (F, D)  bf16

            bqkv = p_ref[layer, 0:1, 0:3 * D]                # (1, 3D) f32
            bo = p_ref[layer, 1:2, 0:D]
            b1 = p_ref[layer, 2:3, 0:F]
            b2 = p_ref[layer, 3:4, 0:D]
            g1 = p_ref[layer, 4:5, 0:D]
            be1 = p_ref[layer, 5:6, 0:D]
            g2 = p_ref[layer, 6:7, 0:D]
            be2 = p_ref[layer, 7:8, 0:D]

            # ---- fused QKV projection over the whole (B*S, D) slab (bf16 MXU, f32 acc) ----
            qkv = jnp.dot(x.astype(bf16), wqkv,
                          preferred_element_type=jnp.float32) + bqkv     # (B*S, 3D)

            # ---- attention: batched over B, static loop over H; no stack / no concat ----
            attn = jnp.zeros((B * S, D), jnp.float32)
            for h in range(H):                                           # static unroll (H = 4)
                c0 = h * Dh
                qh = qkv[:, c0:c0 + Dh].reshape(B, S, Dh).astype(bf16)           # (B,S,Dh)
                kh = qkv[:, D + c0:D + c0 + Dh].reshape(B, S, Dh).astype(bf16)
                vh = qkv[:, 2 * D + c0:2 * D + c0 + Dh].reshape(B, S, Dh).astype(bf16)

                s = jnp.einsum("bqd,bkd->bqk", qh, kh,
                               preferred_element_type=jnp.float32)        # (B, S, S) f32
                s = s + mask                                              # same shape, no bcast
                s = s - jnp.max(s, axis=-1, keepdims=True)
                pexp = jnp.exp(s)
                pexp = pexp * pl.reciprocal(jnp.sum(pexp, axis=-1, keepdims=True),
                                            approx=True)
                oh = jnp.einsum("bqk,bkd->bqd", pexp.astype(bf16), vh,
                                preferred_element_type=jnp.float32)       # (B, S, Dh)

                # head-contracted output projection: accumulate (B*S,Dh)@(Dh,D) on the MXU
                woh = w_ref[layer, row_wo + h * wo_stride:row_wo + h * wo_stride + Dh, 0:D]
                attn = attn + jnp.dot(oh.reshape(B * S, Dh).astype(bf16), woh,
                                      preferred_element_type=jnp.float32)

            # ---- add & norm 1 ----
            x1 = _ln(x + attn + bo, g1, be1)

            # ---- ReLU feed-forward + add & norm 2 ----
            hid = jnp.maximum(
                jnp.dot(x1.astype(bf16), w1,
                        preferred_element_type=jnp.float32) + b1, 0.0)
            ff = jnp.dot(hid.astype(bf16), w2,
                         preferred_element_type=jnp.float32) + b2
            x = _ln(x1 + ff, g2, be2)

        # (B*S, D) store; see header comment on why a (4,128) lane-dense relayout is not a win here.
        o_ref[...] = x

    return kernel


def transformer_encoder_pallas(x, add_mask, layer_params, num_heads):
    """x: (B,S,D) f32; add_mask: (B,S,S) additive f32; layer_params: list of per-layer dicts."""
    B, S, D = x.shape
    L = len(layer_params)
    F = layer_params[0]["w1"].shape[1]
    H = num_heads
    Dh = D // H
    lay = _slab_layout(D, F, H)
    kernel = _make_fused_encoder_kernel(L, B, S, D, H, F, lay)

    w_slab, p_slab = _pack_params(layer_params, D, F, H)
    x2d = x.reshape(B * S, D)

    # advisory cost estimate so XLA can schedule/overlap this tiny custom call
    flops = L * (2 * (B * S) * D * 3 * D        # qkv proj
                 + 4 * B * H * S * S * Dh       # scores + PV
                 + 2 * (B * S) * D * D          # output proj
                 + 4 * (B * S) * D * F)         # FFN (two matmuls)
    transcendentals = L * (B * H * S * S + 3 * B * S)     # exp + softmax recip + LN rsqrt
    bytes_accessed = (x2d.size * 4 + add_mask.size * 4 + w_slab.size * 2
                      + p_slab.size * 4 + B * S * D * 4)
    cost = pl.CostEstimate(flops=int(flops),
                           transcendentals=int(transcendentals),
                           bytes_accessed=int(bytes_accessed))

    out2d = pl.pallas_call(
        kernel,
        out_shape=jax.ShapeDtypeStruct((B * S, D), jnp.float32),
        cost_estimate=cost,
    )(x2d, add_mask, w_slab, p_slab)
    return out2d.reshape(B, S, D)


# ------------------------- pure-JAX reference (for validation) -------------------------
def encoder_layer_ref(x, add_mask, p, num_heads, matmul_dtype=jnp.float32):
    B, S, D = x.shape
    H = num_heads
    Dh = D // H

    def mm(a, b):
        return jnp.dot(a.astype(matmul_dtype), b.astype(matmul_dtype),
                       preferred_element_type=jnp.float32)

    qkv = mm(x, p["wqkv"]) + p["bqkv"]
    q, k, v = jnp.split(qkv, 3, axis=-1)
    q = (q / np.sqrt(Dh)).reshape(B, S, H, Dh).transpose(0, 2, 1, 3)
    k = k.reshape(B, S, H, Dh).transpose(0, 2, 1, 3)
    v = v.reshape(B, S, H, Dh).transpose(0, 2, 1, 3)
    s = jnp.einsum("bhqd,bhkd->bhqk", q.astype(matmul_dtype), k.astype(matmul_dtype),
                   preferred_element_type=jnp.float32)
    s = s + add_mask[:, None, :, :]
    a = jax.nn.softmax(s, axis=-1)
    ctx = jnp.einsum("bhqk,bhkd->bhqd", a.astype(matmul_dtype), v.astype(matmul_dtype),
                     preferred_element_type=jnp.float32)
    ctx = ctx.transpose(0, 2, 1, 3).reshape(B, S, D)
    attn = mm(ctx, p["wo"]) + p["bo"]
    x1 = _ln(x + attn, p["g1"], p["be1"])
    hid = jax.nn.relu(mm(x1, p["w1"]) + p["b1"])
    ff = mm(hid, p["w2"]) + p["b2"]
    return _ln(x1 + ff, p["g2"], p["be2"])


# ------------------------- mask construction (host-side glue) -------------------------
def build_attn_mask(lengths, S, window):
    """Replicates get_3d_masks + window_mask. Returns (B, S, S) bool, True = disallowed.
    (The PyTorch code replicates the same mask per head, so the head dim is dropped.)"""
    wm = np.zeros((S, S), dtype=bool)
    for i in range(S):
        wm[i, max(0, i - window):i + window + 1] = True
    wm_inv = ~wm
    out = np.zeros((len(lengths), S, S), dtype=bool)
    for bi, l in enumerate(lengths):
        m = np.ones((S, S), dtype=np.float32)
        m[:l, :l] = 0.0
        m = np.clip(m - np.eye(S, dtype=np.float32), 0.0, None).astype(bool)
        out[bi] = np.logical_or(wm_inv, m)
    return out


def init_layer_params(key, D, F):
    ks = jax.random.split(key, 12)

    def w(k, shape, scale=0.1):
        return (scale * jax.random.normal(k, shape)).astype(jnp.float32)

    return {
        "wqkv": w(ks[0], (D, 3 * D)), "bqkv": w(ks[1], (1, 3 * D)),
        "wo":   w(ks[2], (D, D)),     "bo":   w(ks[3], (1, D)),
        "w1":   w(ks[4], (D, F)),     "b1":   w(ks[5], (1, F)),
        "w2":   w(ks[6], (F, D)),     "b2":   w(ks[7], (1, D)),
        "g1": (1.0 + w(ks[8], (1, D), 0.05)).astype(jnp.float32),
        "be1": w(ks[9], (1, D), 0.05),
        "g2": (1.0 + w(ks[10], (1, D), 0.05)).astype(jnp.float32),
        "be2": w(ks[11], (1, D), 0.05),
    }


if __name__ == "__main__":
    # params: emb_input_dim=32, num_heads=4, dim_feedforward=64,
    #         num_transformer_layers=2, mask_windowing=2 (window-mask branch)
    B, S, D, H, F = 2, 8, 32, 4, 64
    NUM_LAYERS = 2
    WINDOW = 2

    key = jax.random.PRNGKey(0)
    key, xk = jax.random.split(key)
    encodings = jax.random.normal(xk, (B, S, D), dtype=jnp.float32)
    lengths = [8, 5]                      # per-sequence valid lengths
    masks = jnp.asarray(np.array([[1.0] * l + [0.0] * (S - l) for l in lengths],
                                 dtype=np.float32))   # carried through untouched
    extras = None

    bool_mask = build_attn_mask(lengths, S, WINDOW)                   # (B, S, S)
    add_mask = jnp.where(jnp.asarray(bool_mask), jnp.float32(-1e30),
                         jnp.float32(0.0)).astype(jnp.float32)

    layer_params = []
    for _ in range(NUM_LAYERS):
        key, lk = jax.random.split(key)
        layer_params.append(init_layer_params(lk, D, F))

    # --- fused Pallas forward (both layers, whole batch, one kernel launch) ---
    out = transformer_encoder_pallas(encodings, add_mask, layer_params, H)
    out = jax.block_until_ready(out)

    # --- references: bf16-matmul-matched (tight) and pure-f32 (loose, bf16 rounding) ---
    ref_bf16 = encodings
    ref_f32 = encodings
    for p in layer_params:
        ref_bf16 = encoder_layer_ref(ref_bf16, add_mask, p, H, jnp.bfloat16)
        ref_f32 = encoder_layer_ref(ref_f32, add_mask, p, H, jnp.float32)

    result = (out, masks, lengths, extras)   # forward returns the same 4-tuple

    assert out.shape == (B, S, D)
    assert bool(jnp.allclose(out, ref_bf16, atol=1e-2, rtol=1e-2)), \
        "mismatch vs bf16-matched reference"
    assert bool(jnp.allclose(out, ref_f32, atol=5e-2, rtol=5e-2)), \
        "mismatch vs f32 reference"
    print("KERNEL_OK")
</pallas_src>

<mosaic_0001>
module attributes {stable_mosaic.version = 11 : i64} {
  func.func @kernel(%arg0: memref<16x32xf32, #tpu.memory_space<vmem>>, %arg1: memref<2x8x8xf32, #tpu.memory_space<vmem>>, %arg2: memref<2x192x96xbf16, #tpu.memory_space<vmem>>, %arg3: memref<2x8x96xf32, #tpu.memory_space<vmem>>, %arg4: memref<16x32xf32, #tpu.memory_space<vmem>>) attributes {dimension_semantics = [], scalar_prefetch = 0 : i64, scratch_operands = 0 : i64, tpu.core_type = #tpu.core_type<tc>} {
    %c0 = arith.constant 0 : index
    %c0_0 = arith.constant 0 : index
    %0 = vector.load %arg0[%c0, %c0_0] : memref<16x32xf32, #tpu.memory_space<vmem>>, vector<16x32xf32>
    %c0_1 = arith.constant 0 : index
    %c0_2 = arith.constant 0 : index
    %c0_3 = arith.constant 0 : index
    %1 = vector.load %arg1[%c0_1, %c0_2, %c0_3] : memref<2x8x8xf32, #tpu.memory_space<vmem>>, vector<2x8x8xf32>
    %c0_4 = arith.constant 0 : index
    %c0_5 = arith.constant 0 : index
    %c0_6 = arith.constant 0 : index
    %2 = vector.load %arg2[%c0_4, %c0_5, %c0_6] : memref<2x192x96xbf16, #tpu.memory_space<vmem>>, vector<1x32x96xbf16>
    %3 = vector.shape_cast %2 : vector<1x32x96xbf16> to vector<32x96xbf16>
    %c0_7 = arith.constant 0 : index
    %c96 = arith.constant 96 : index
    %c0_8 = arith.constant 0 : index
    %4 = vector.load %arg2[%c0_7, %c96, %c0_8] : memref<2x192x96xbf16, #tpu.memory_space<vmem>>, vector<1x32x64xbf16>
    %5 = vector.shape_cast %4 : vector<1x32x64xbf16> to vector<32x64xbf16>
    %c0_9 = arith.constant 0 : index
    %c128 = arith.constant 128 : index
    %c0_10 = arith.constant 0 : index
    %6 = vector.load %arg2[%c0_9, %c128, %c0_10] : memref<2x192x96xbf16, #tpu.memory_space<vmem>>, vector<1x64x32xbf16>
    %7 = vector.shape_cast %6 : vector<1x64x32xbf16> to vector<64x32xbf16>
    %c0_11 = arith.constant 0 : index
    %c0_12 = arith.constant 0 : index
    %c0_13 = arith.constant 0 : index
    %8 = vector.load %arg3[%c0_11, %c0_12, %c0_13] : memref<2x8x96xf32, #tpu.memory_space<vmem>>, vector<1x1x96xf32>
    %9 = vector.shape_cast %8 : vector<1x1x96xf32> to vector<1x96xf32>
    %c0_14 = arith.constant 0 : index
    %c1 = arith.constant 1 : index
    %c0_15 = arith.constant 0 : index
    %10 = vector.load %arg3[%c0_14, %c1, %c0_15] : memref<2x8x96xf32, #tpu.memory_space<vmem>>, vector<1x1x32xf32>
    %11 = vector.shape_cast %10 : vector<1x1x32xf32> to vector<1x32xf32>
    %c0_16 = arith.constant 0 : index
    %c2 = arith.constant 2 : index
    %c0_17 = arith.constant 0 : index
    %12 = vector.load %arg3[%c0_16, %c2, %c0_17] : memref<2x8x96xf32, #tpu.memory_space<vmem>>, vector<1x1x64xf32>
    %13 = vector.shape_cast %12 : vector<1x1x64xf32> to vector<1x64xf32>
    %c0_18 = arith.constant 0 : index
    %c3 = arith.constant 3 : index
    %c0_19 = arith.constant 0 : index
    %14 = vector.load %arg3[%c0_18, %c3, %c0_19] : memref<2x8x96xf32, #tpu.memory_space<vmem>>, vector<1x1x32xf32>
    %15 = vector.shape_cast %14 : vector<1x1x32xf32> to vector<1x32xf32>
    %c0_20 = arith.constant 0 : index
    %c4 = arith.constant 4 : index
    %c0_21 = arith.constant 0 : index
    %16 = vector.load %arg3[%c0_20, %c4, %c0_21] : memref<2x8x96xf32, #tpu.memory_space<vmem>>, vector<1x1x32xf32>
    %17 = vector.shape_cast %16 : vector<1x1x32xf32> to vector<1x32xf32>
    %c0_22 = arith.constant 0 : index
    %c5 = arith.constant 5 : index
    %c0_23 = arith.constant 0 : index
    %18 = vector.load %arg3[%c0_22, %c5, %c0_23] : memref<2x8x96xf32, #tpu.memory_space<vmem>>, vector<1x1x32xf32>
    %19 = vector.shape_cast %18 : vector<1x1x32xf32> to vector<1x32xf32>
    %c0_24 = arith.constant 0 : index
    %c6 = arith.constant 6 : index
    %c0_25 = arith.constant 0 : index
    %20 = vector.load %arg3[%c0_24, %c6, %c0_25] : memref<2x8x96xf32, #tpu.memory_space<vmem>>, vector<1x1x32xf32>
    %21 = vector.shape_cast %20 : vector<1x1x32xf32> to vector<1x32xf32>
    %c0_26 = arith.constant 0 : index
    %c7 = arith.constant 7 : index
    %c0_27 = arith.constant 0 : index
    %22 = vector.load %arg3[%c0_26, %c7, %c0_27] : memref<2x8x96xf32, #tpu.memory_space<vmem>>, vector<1x1x32xf32>
    %23 = vector.shape_cast %22 : vector<1x1x32xf32> to vector<1x32xf32>
    %24 = arith.truncf %0 : vector<16x32xf32> to vector<16x32xbf16>
    %cst = arith.constant dense<0.000000e+00> : vector<16x96xf32>
    %25 = tpu.matmul %24, %3, %cst {dimension_numbers = #tpu.dot_dimension_numbers<[1], [0], [0], [1], [0, 0, 1, 1], [], []>} : vector<16x32xbf16>, vector<32x96xbf16>, vector<16x96xf32> -> vector<16x96xf32>
    %26 = vector.broadcast %9 : vector<1x96xf32> to vector<16x96xf32>
    %27 = arith.addf %25, %26 : vector<16x96xf32>
    %cst_28 = arith.constant 0.000000e+00 : f32
    %28 = vector.broadcast %cst_28 : f32 to vector<16x32xf32>
    %29 = vector.extract_strided_slice %27 {offsets = [0, 0], sizes = [16, 8], strides = [1, 1]} : vector<16x96xf32> to vector<16x8xf32>
    %30 = vector.shape_cast %29 : vector<16x8xf32> to vector<2x8x8xf32>
    %31 = arith.truncf %30 : vector<2x8x8xf32> to vector<2x8x8xbf16>
    %32 = vector.extract_strided_slice %27 {offsets = [0, 32], sizes = [16, 8], strides = [1, 1]} : vector<16x96xf32> to vector<16x8xf32>
    %33 = vector.shape_cast %32 : vector<16x8xf32> to vector<2x8x8xf32>
    %34 = arith.truncf %33 : vector<2x8x8xf32> to vector<2x8x8xbf16>
    %35 = vector.extract_strided_slice %27 {offsets = [0, 64], sizes = [16, 8], strides = [1, 1]} : vector<16x96xf32> to vector<16x8xf32>
    %36 = vector.shape_cast %35 : vector<16x8xf32> to vector<2x8x8xf32>
    %37 = arith.truncf %36 : vector<2x8x8xf32> to vector<2x8x8xbf16>
    "tpu.trace_start"() <{level = 10 : i32, message = "bqd,bkd->bqk"}> : () -> ()
    %cst_29 = arith.constant dense<0.000000e+00> : vector<2x8x8xf32>
    %38 = tpu.matmul %31, %34, %cst_29 {dimension_numbers = #tpu.dot_dimension_numbers<[2], [2], [1], [1], [0, 0, 0, 1, 1, 1], [0], [0]>} : vector<2x8x8xbf16>, vector<2x8x8xbf16>, vector<2x8x8xf32> -> vector<2x8x8xf32>
    "tpu.trace_stop"() : () -> ()
    %39 = arith.addf %38, %1 : vector<2x8x8xf32>
    %cst_30 = arith.constant dense<0xFF800000> : vector<2x8xf32>
    %40 = vector.multi_reduction <maximumf>, %39, %cst_30 [2] : vector<2x8x8xf32> to vector<2x8xf32>
    %41 = vector.shape_cast %40 : vector<2x8xf32> to vector<2x8x1xf32>
    %42 = vector.broadcast %41 : vector<2x8x1xf32> to vector<2x8x8xf32>
    %43 = arith.subf %39, %42 : vector<2x8x8xf32>
    %44 = math.exp %43 : vector<2x8x8xf32>
    %cst_31 = arith.constant dense<0.000000e+00> : vector<2x8xf32>
    %45 = vector.multi_reduction <add>, %44, %cst_31 [2] : vector<2x8x8xf32> to vector<2x8xf32>
    %46 = vector.shape_cast %45 : vector<2x8xf32> to vector<2x8x1xf32>
    %47 = tpu.reciprocal %46 {approx = true} : vector<2x8x1xf32> -> vector<2x8x1xf32>
    %48 = vector.broadcast %47 : vector<2x8x1xf32> to vector<2x8x8xf32>
    %49 = arith.mulf %44, %48 : vector<2x8x8xf32>
    %50 = arith.truncf %49 : vector<2x8x8xf32> to vector<2x8x8xbf16>
    "tpu.trace_start"() <{level = 10 : i32, message = "bqk,bkd->bqd"}> : () -> ()
    %cst_32 = arith.constant dense<0.000000e+00> : vector<2x8x8xf32>
    %51 = tpu.matmul %50, %37, %cst_32 {dimension_numbers = #tpu.dot_dimension_numbers<[2], [1], [1], [2], [0, 0, 0, 1, 1, 2], [0], [0]>} : vector<2x8x8xbf16>, vector<2x8x8xbf16>, vector<2x8x8xf32> -> vector<2x8x8xf32>
    "tpu.trace_stop"() : () -> ()
    %c0_33 = arith.constant 0 : index
    %c32 = arith.constant 32 : index
    %c0_34 = arith.constant 0 : index
    %52 = vector.load %arg2[%c0_33, %c32, %c0_34] : memref<2x192x96xbf16, #tpu.memory_space<vmem>>, vector<1x8x32xbf16>
    %53 = vector.shape_cast %52 : vector<1x8x32xbf16> to vector<8x32xbf16>
    %54 = vector.shape_cast %51 : vector<2x8x8xf32> to vector<16x8xf32>
    %55 = arith.truncf %54 : vector<16x8xf32> to vector<16x8xbf16>
    %cst_35 = arith.constant dense<0.000000e+00> : vector<16x32xf32>
    %56 = tpu.matmul %55, %53, %cst_35 {dimension_numbers = #tpu.dot_dimension_numbers<[1], [0], [0], [1], [0, 0, 1, 1], [], []>} : vector<16x8xbf16>, vector<8x32xbf16>, vector<16x32xf32> -> vector<16x32xf32>
    %57 = arith.addf %28, %56 : vector<16x32xf32>
    %58 = vector.extract_strided_slice %27 {offsets = [0, 8], sizes = [16, 8], strides = [1, 1]} : vector<16x96xf32> to vector<16x8xf32>
    %59 = vector.shape_cast %58 : vector<16x8xf32> to vector<2x8x8xf32>
    %60 = arith.truncf %59 : vector<2x8x8xf32> to vector<2x8x8xbf16>
    %61 = vector.extract_strided_slice %27 {offsets = [0, 40], sizes = [16, 8], strides = [1, 1]} : vector<16x96xf32> to vector<16x8xf32>
    %62 = vector.shape_cast %61 : vector<16x8xf32> to vector<2x8x8xf32>
    %63 = arith.truncf %62 : vector<2x8x8xf32> to vector<2x8x8xbf16>
    %64 = vector.extract_strided_slice %27 {offsets = [0, 72], sizes = [16, 8], strides = [1, 1]} : vector<16x96xf32> to vector<16x8xf32>
    %65 = vector.shape_cast %64 : vector<16x8xf32> to vector<2x8x8xf32>
    %66 = arith.truncf %65 : vector<2x8x8xf32> to vector<2x8x8xbf16>
    "tpu.trace_start"() <{level = 10 : i32, message = "bqd,bkd->bqk"}> : () -> ()
    %cst_36 = arith.constant dense<0.000000e+00> : vector<2x8x8xf32>
    %67 = tpu.matmul %60, %63, %cst_36 {dimension_numbers = #tpu.dot_dimension_numbers<[2], [2], [1], [1], [0, 0, 0, 1, 1, 1], [0], [0]>} : vector<2x8x8xbf16>, vector<2x8x8xbf16>, vector<2x8x8xf32> -> vector<2x8x8xf32>
    "tpu.trace_stop"() : () -> ()
    %68 = arith.addf %67, %1 : vector<2x8x8xf32>
    %cst_37 = arith.constant dense<0xFF800000> : vector<2x8xf32>
    %69 = vector.multi_reduction <maximumf>, %68, %cst_37 [2] : vector<2x8x8xf32> to vector<2x8xf32>
    %70 = vector.shape_cast %69 : vector<2x8xf32> to vector<2x8x1xf32>
    %71 = vector.broadcast %70 : vector<2x8x1xf32> to vector<2x8x8xf32>
    %72 = arith.subf %68, %71 : vector<2x8x8xf32>
    %73 = math.exp %72 : vector<2x8x8xf32>
    %cst_38 = arith.constant dense<0.000000e+00> : vector<2x8xf32>
    %74 = vector.multi_reduction <add>, %73, %cst_38 [2] : vector<2x8x8xf32> to vector<2x8xf32>
    %75 = vector.shape_cast %74 : vector<2x8xf32> to vector<2x8x1xf32>
    %76 = tpu.reciprocal %75 {approx = true} : vector<2x8x1xf32> -> vector<2x8x1xf32>
    %77 = vector.broadcast %76 : vector<2x8x1xf32> to vector<2x8x8xf32>
    %78 = arith.mulf %73, %77 : vector<2x8x8xf32>
    %79 = arith.truncf %78 : vector<2x8x8xf32> to vector<2x8x8xbf16>
    "tpu.trace_start"() <{level = 10 : i32, message = "bqk,bkd->bqd"}> : () -> ()
    %cst_39 = arith.constant dense<0.000000e+00> : vector<2x8x8xf32>
    %80 = tpu.matmul %79, %66, %cst_39 {dimension_numbers = #tpu.dot_dimension_numbers<[2], [1], [1], [2], [0, 0, 0, 1, 1, 2], [0], [0]>} : vector<2x8x8xbf16>, vector<2x8x8xbf16>, vector<2x8x8xf32> -> vector<2x8x8xf32>
    "tpu.trace_stop"() : () -> ()
    %c0_40 = arith.constant 0 : index
    %c48 = arith.constant 48 : index
    %c0_41 = arith.constant 0 : index
    %81 = vector.load %arg2[%c0_40, %c48, %c0_41] : memref<2x192x96xbf16, #tpu.memory_space<vmem>>, vector<1x8x32xbf16>
    %82 = vector.shape_cast %81 : vector<1x8x32xbf16> to vector<8x32xbf16>
    %83 = vector.shape_cast %80 : vector<2x8x8xf32> to vector<16x8xf32>
    %84 = arith.truncf %83 : vector<16x8xf32> to vector<16x8xbf16>
    %cst_42 = arith.constant dense<0.000000e+00> : vector<16x32xf32>
    %85 = tpu.matmul %84, %82, %cst_42 {dimension_numbers = #tpu.dot_dimension_numbers<[1], [0], [0], [1], [0, 0, 1, 1], [], []>} : vector<16x8xbf16>, vector<8x32xbf16>, vector<16x32xf32> -> vector<16x32xf32>
    %86 = arith.addf %57, %85 : vector<16x32xf32>
    %87 = vector.extract_strided_slice %27 {offsets = [0, 16], sizes = [16, 8], strides = [1, 1]} : vector<16x96xf32> to vector<16x8xf32>
    %88 = vector.shape_cast %87 : vector<16x8xf32> to vector<2x8x8xf32>
    %89 = arith.truncf %88 : vector<2x8x8xf32> to vector<2x8x8xbf16>
    %90 = vector.extract_strided_slice %27 {offsets = [0, 48], sizes = [16, 8], strides = [1, 1]} : vector<16x96xf32> to vector<16x8xf32>
    %91 = vector.shape_cast %90 : vector<16x8xf32> to vector<2x8x8xf32>
    %92 = arith.truncf %91 : vector<2x8x8xf32> to vector<2x8x8xbf16>
    %93 = vector.extract_strided_slice %27 {offsets = [0, 80], sizes = [16, 8], strides = [1, 1]} : vector<16x96xf32> to vector<16x8xf32>
    %94 = vector.shape_cast %93 : vector<16x8xf32> to vector<2x8x8xf32>
    %95 = arith.truncf %94 : vector<2x8x8xf32> to vector<2x8x8xbf16>
    "tpu.trace_start"() <{level = 10 : i32, message = "bqd,bkd->bqk"}> : () -> ()
    %cst_43 = arith.constant dense<0.000000e+00> : vector<2x8x8xf32>
    %96 = tpu.matmul %89, %92, %cst_43 {dimension_numbers = #tpu.dot_dimension_numbers<[2], [2], [1], [1], [0, 0, 0, 1, 1, 1], [0], [0]>} : vector<2x8x8xbf16>, vector<2x8x8xbf16>, vector<2x8x8xf32> -> vector<2x8x8xf32>
    "tpu.trace_stop"() : () -> ()
    %97 = arith.addf %96, %1 : vector<2x8x8xf32>
    %cst_44 = arith.constant dense<0xFF800000> : vector<2x8xf32>
    %98 = vector.multi_reduction <maximumf>, %97, %cst_44 [2] : vector<2x8x8xf32> to vector<2x8xf32>
    %99 = vector.shape_cast %98 : vector<2x8xf32> to vector<2x8x1xf32>
    %100 = vector.broadcast %99 : vector<2x8x1xf32> to vector<2x8x8xf32>
    %101 = arith.subf %97, %100 : vector<2x8x8xf32>
    %102 = math.exp %101 : vector<2x8x8xf32>
    %cst_45 = arith.constant dense<0.000000e+00> : vector<2x8xf32>
    %103 = vector.multi_reduction <add>, %102, %cst_45 [2] : vector<2x8x8xf32> to vector<2x8xf32>
    %104 = vector.shape_cast %103 : vector<2x8xf32> to vector<2x8x1xf32>
    %105 = tpu.reciprocal %104 {approx = true} : vector<2x8x1xf32> -> vector<2x8x1xf32>
    %106 = vector.broadcast %105 : vector<2x8x1xf32> to vector<2x8x8xf32>
    %107 = arith.mulf %102, %106 : vector<2x8x8xf32>
    %108 = arith.truncf %107 : vector<2x8x8xf32> to vector<2x8x8xbf16>
    "tpu.trace_start"() <{level = 10 : i32, message = "bqk,bkd->bqd"}> : () -> ()
    %cst_46 = arith.constant dense<0.000000e+00> : vector<2x8x8xf32>
    %109 = tpu.matmul %108, %95, %cst_46 {dimension_numbers = #tpu.dot_dimension_numbers<[2], [1], [1], [2], [0, 0, 0, 1, 1, 2], [0], [0]>} : vector<2x8x8xbf16>, vector<2x8x8xbf16>, vector<2x8x8xf32> -> vector<2x8x8xf32>
    "tpu.trace_stop"() : () -> ()
    %c0_47 = arith.constant 0 : index
    %c64 = arith.constant 64 : index
    %c0_48 = arith.constant 0 : index
    %110 = vector.load %arg2[%c0_47, %c64, %c0_48] : memref<2x192x96xbf16, #tpu.memory_space<vmem>>, vector<1x8x32xbf16>
    %111 = vector.shape_cast %110 : vector<1x8x32xbf16> to vector<8x32xbf16>
    %112 = vector.shape_cast %109 : vector<2x8x8xf32> to vector<16x8xf32>
    %113 = arith.truncf %112 : vector<16x8xf32> to vector<16x8xbf16>
    %cst_49 = arith.constant dense<0.000000e+00> : vector<16x32xf32>
    %114 = tpu.matmul %113, %111, %cst_49 {dimension_numbers = #tpu.dot_dimension_numbers<[1], [0], [0], [1], [0, 0, 1, 1], [], []>} : vector<16x8xbf16>, vector<8x32xbf16>, vector<16x32xf32> -> vector<16x32xf32>
    %115 = arith.addf %86, %114 : vector<16x32xf32>
    %116 = vector.extract_strided_slice %27 {offsets = [0, 24], sizes = [16, 8], strides = [1, 1]} : vector<16x96xf32> to vector<16x8xf32>
    %117 = vector.shape_cast %116 : vector<16x8xf32> to vector<2x8x8xf32>
    %118 = arith.truncf %117 : vector<2x8x8xf32> to vector<2x8x8xbf16>
    %119 = vector.extract_strided_slice %27 {offsets = [0, 56], sizes = [16, 8], strides = [1, 1]} : vector<16x96xf32> to vector<16x8xf32>
    %120 = vector.shape_cast %119 : vector<16x8xf32> to vector<2x8x8xf32>
    %121 = arith.truncf %120 : vector<2x8x8xf32> to vector<2x8x8xbf16>
    %122 = vector.extract_strided_slice %27 {offsets = [0, 88], sizes = [16, 8], strides = [1, 1]} : vector<16x96xf32> to vector<16x8xf32>
    %123 = vector.shape_cast %122 : vector<16x8xf32> to vector<2x8x8xf32>
    %124 = arith.truncf %123 : vector<2x8x8xf32> to vector<2x8x8xbf16>
    "tpu.trace_start"() <{level = 10 : i32, message = "bqd,bkd->bqk"}> : () -> ()
    %cst_50 = arith.constant dense<0.000000e+00> : vector<2x8x8xf32>
    %125 = tpu.matmul %118, %121, %cst_50 {dimension_numbers = #tpu.dot_dimension_numbers<[2], [2], [1], [1], [0, 0, 0, 1, 1, 1], [0], [0]>} : vector<2x8x8xbf16>, vector<2x8x8xbf16>, vector<2x8x8xf32> -> vector<2x8x8xf32>
    "tpu.trace_stop"() : () -> ()
    %126 = arith.addf %125, %1 : vector<2x8x8xf32>
    %cst_51 = arith.constant dense<0xFF800000> : vector<2x8xf32>
    %127 = vector.multi_reduction <maximumf>, %126, %cst_51 [2] : vector<2x8x8xf32> to vector<2x8xf32>
    %128 = vector.shape_cast %127 : vector<2x8xf32> to vector<2x8x1xf32>
    %129 = vector.broadcast %128 : vector<2x8x1xf32> to vector<2x8x8xf32>
    %130 = arith.subf %126, %129 : vector<2x8x8xf32>
    %131 = math.exp %130 : vector<2x8x8xf32>
    %cst_52 = arith.constant dense<0.000000e+00> : vector<2x8xf32>
    %132 = vector.multi_reduction <add>, %131, %cst_52 [2] : vector<2x8x8xf32> to vector<2x8xf32>
    %133 = vector.shape_cast %132 : vector<2x8xf32> to vector<2x8x1xf32>
    %134 = tpu.reciprocal %133 {approx = true} : vector<2x8x1xf32> -> vector<2x8x1xf32>
    %135 = vector.broadcast %134 : vector<2x8x1xf32> to vector<2x8x8xf32>
    %136 = arith.mulf %131, %135 : vector<2x8x8xf32>
    %137 = arith.truncf %136 : vector<2x8x8xf32> to vector<2x8x8xbf16>
    "tpu.trace_start"() <{level = 10 : i32, message = "bqk,bkd->bqd"}> : () -> ()
    %cst_53 = arith.constant dense<0.000000e+00> : vector<2x8x8xf32>
    %138 = tpu.matmul %137, %124, %cst_53 {dimension_numbers = #tpu.dot_dimension_numbers<[2], [1], [1], [2], [0, 0, 0, 1, 1, 2], [0], [0]>} : vector<2x8x8xbf16>, vector<2x8x8xbf16>, vector<2x8x8xf32> -> vector<2x8x8xf32>
    "tpu.trace_stop"() : () -> ()
    %c0_54 = arith.constant 0 : index
    %c80 = arith.constant 80 : index
    %c0_55 = arith.constant 0 : index
    %139 = vector.load %arg2[%c0_54, %c80, %c0_55] : memref<2x192x96xbf16, #tpu.memory_space<vmem>>, vector<1x8x32xbf16>
    %140 = vector.shape_cast %139 : vector<1x8x32xbf16> to vector<8x32xbf16>
    %141 = vector.shape_cast %138 : vector<2x8x8xf32> to vector<16x8xf32>
    %142 = arith.truncf %141 : vector<16x8xf32> to vector<16x8xbf16>
    %cst_56 = arith.constant dense<0.000000e+00> : vector<16x32xf32>
    %143 = tpu.matmul %142, %140, %cst_56 {dimension_numbers = #tpu.dot_dimension_numbers<[1], [0], [0], [1], [0, 0, 1, 1], [], []>} : vector<16x8xbf16>, vector<8x32xbf16>, vector<16x32xf32> -> vector<16x32xf32>
    %144 = arith.addf %115, %143 : vector<16x32xf32>
    %145 = arith.addf %0, %144 : vector<16x32xf32>
    %146 = vector.broadcast %11 : vector<1x32xf32> to vector<16x32xf32>
    %147 = arith.addf %145, %146 : vector<16x32xf32>
    %cst_57 = arith.constant dense<0.000000e+00> : vector<16xf32>
    %148 = vector.multi_reduction <add>, %147, %cst_57 [1] : vector<16x32xf32> to vector<16xf32>
    %149 = vector.shape_cast %148 : vector<16xf32> to vector<16x1xf32>
    %cst_58 = arith.constant 3.200000e+01 : f32
    %150 = vector.broadcast %cst_58 : f32 to vector<16x1xf32>
    %151 = arith.divf %149, %150 : vector<16x1xf32>
    %152 = vector.broadcast %151 : vector<16x1xf32> to vector<16x32xf32>
    %153 = arith.subf %147, %152 : vector<16x32xf32>
    %154 = arith.mulf %153, %153 : vector<16x32xf32>
    %cst_59 = arith.constant dense<0.000000e+00> : vector<16xf32>
    %155 = vector.multi_reduction <add>, %154, %cst_59 [1] : vector<16x32xf32> to vector<16xf32>
    %156 = vector.shape_cast %155 : vector<16xf32> to vector<16x1xf32>
    %cst_60 = arith.constant 3.200000e+01 : f32
    %157 = vector.broadcast %cst_60 : f32 to vector<16x1xf32>
    %158 = arith.divf %156, %157 : vector<16x1xf32>
    %159 = vector.broadcast %151 : vector<16x1xf32> to vector<16x32xf32>
    %160 = arith.subf %147, %159 : vector<16x32xf32>
    %cst_61 = arith.constant 9.99999974E-6 : f32
    %161 = vector.broadcast %cst_61 : f32 to vector<16x1xf32>
    %162 = arith.addf %158, %161 : vector<16x1xf32>
    %163 = math.rsqrt %162 : vector<16x1xf32>
    %164 = vector.broadcast %163 : vector<16x1xf32> to vector<16x32xf32>
    %165 = arith.mulf %160, %164 : vector<16x32xf32>
    %166 = vector.broadcast %17 : vector<1x32xf32> to vector<16x32xf32>
    %167 = arith.mulf %165, %166 : vector<16x32xf32>
    %168 = vector.broadcast %19 : vector<1x32xf32> to vector<16x32xf32>
    %169 = arith.addf %167, %168 : vector<16x32xf32>
    %170 = arith.truncf %169 : vector<16x32xf32> to vector<16x32xbf16>
    %cst_62 = arith.constant dense<0.000000e+00> : vector<16x64xf32>
    %171 = tpu.matmul %170, %5, %cst_62 {dimension_numbers = #tpu.dot_dimension_numbers<[1], [0], [0], [1], [0, 0, 1, 1], [], []>} : vector<16x32xbf16>, vector<32x64xbf16>, vector<16x64xf32> -> vector<16x64xf32>
    %172 = vector.broadcast %13 : vector<1x64xf32> to vector<16x64xf32>
    %173 = arith.addf %171, %172 : vector<16x64xf32>
    %cst_63 = arith.constant 0.000000e+00 : f32
    %174 = vector.broadcast %cst_63 : f32 to vector<16x64xf32>
    %175 = arith.maximumf %173, %174 : vector<16x64xf32>
    %176 = arith.truncf %175 : vector<16x64xf32> to vector<16x64xbf16>
    %cst_64 = arith.constant dense<0.000000e+00> : vector<16x32xf32>
    %177 = tpu.matmul %176, %7, %cst_64 {dimension_numbers = #tpu.dot_dimension_numbers<[1], [0], [0], [1], [0, 0, 1, 1], [], []>} : vector<16x64xbf16>, vector<64x32xbf16>, vector<16x32xf32> -> vector<16x32xf32>
    %178 = vector.broadcast %15 : vector<1x32xf32> to vector<16x32xf32>
    %179 = arith.addf %177, %178 : vector<16x32xf32>
    %180 = arith.addf %169, %179 : vector<16x32xf32>
    %cst_65 = arith.constant dense<0.000000e+00> : vector<16xf32>
    %181 = vector.multi_reduction <add>, %180, %cst_65 [1] : vector<16x32xf32> to vector<16xf32>
    %182 = vector.shape_cast %181 : vector<16xf32> to vector<16x1xf32>
    %cst_66 = arith.constant 3.200000e+01 : f32
    %183 = vector.broadcast %cst_66 : f32 to vector<16x1xf32>
    %184 = arith.divf %182, %183 : vector<16x1xf32>
    %185 = vector.broadcast %184 : vector<16x1xf32> to vector<16x32xf32>
    %186 = arith.subf %180, %185 : vector<16x32xf32>
    %187 = arith.mulf %186, %186 : vector<16x32xf32>
    %cst_67 = arith.constant dense<0.000000e+00> : vector<16xf32>
    %188 = vector.multi_reduction <add>, %187, %cst_67 [1] : vector<16x32xf32> to vector<16xf32>
    %189 = vector.shape_cast %188 : vector<16xf32> to vector<16x1xf32>
    %cst_68 = arith.constant 3.200000e+01 : f32
    %190 = vector.broadcast %cst_68 : f32 to vector<16x1xf32>
    %191 = arith.divf %189, %190 : vector<16x1xf32>
    %192 = vector.broadcast %184 : vector<16x1xf32> to vector<16x32xf32>
    %193 = arith.subf %180, %192 : vector<16x32xf32>
    %cst_69 = arith.constant 9.99999974E-6 : f32
    %194 = vector.broadcast %cst_69 : f32 to vector<16x1xf32>
    %195 = arith.addf %191, %194 : vector<16x1xf32>
    %196 = math.rsqrt %195 : vector<16x1xf32>
    %197 = vector.broadcast %196 : vector<16x1xf32> to vector<16x32xf32>
    %198 = arith.mulf %193, %197 : vector<16x32xf32>
    %199 = vector.broadcast %21 : vector<1x32xf32> to vector<16x32xf32>
    %200 = arith.mulf %198, %199 : vector<16x32xf32>
    %201 = vector.broadcast %23 : vector<1x32xf32> to vector<16x32xf32>
    %202 = arith.addf %200, %201 : vector<16x32xf32>
    %c1_70 = arith.constant 1 : index
    %c0_71 = arith.constant 0 : index
    %c0_72 = arith.constant 0 : index
    %203 = vector.load %arg2[%c1_70, %c0_71, %c0_72] : memref<2x192x96xbf16, #tpu.memory_space<vmem>>, vector<1x32x96xbf16>
    %204 = vector.shape_cast %203 : vector<1x32x96xbf16> to vector<32x96xbf16>
    %c1_73 = arith.constant 1 : index
    %c96_74 = arith.constant 96 : index
    %c0_75 = arith.constant 0 : index
    %205 = vector.load %arg2[%c1_73, %c96_74, %c0_75] : memref<2x192x96xbf16, #tpu.memory_space<vmem>>, vector<1x32x64xbf16>
    %206 = vector.shape_cast %205 : vector<1x32x64xbf16> to vector<32x64xbf16>
    %c1_76 = arith.constant 1 : index
    %c128_77 = arith.constant 128 : index
    %c0_78 = arith.constant 0 : index
    %207 = vector.load %arg2[%c1_76, %c128_77, %c0_78] : memref<2x192x96xbf16, #tpu.memory_space<vmem>>, vector<1x64x32xbf16>
    %208 = vector.shape_cast %207 : vector<1x64x32xbf16> to vector<64x32xbf16>
    %c1_79 = arith.constant 1 : index
    %c0_80 = arith.constant 0 : index
    %c0_81 = arith.constant 0 : index
    %209 = vector.load %arg3[%c1_79, %c0_80, %c0_81] : memref<2x8x96xf32, #tpu.memory_space<vmem>>, vector<1x1x96xf32>
    %210 = vector.shape_cast %209 : vector<1x1x96xf32> to vector<1x96xf32>
    %c1_82 = arith.constant 1 : index
    %c1_83 = arith.constant 1 : index
    %c0_84 = arith.constant 0 : index
    %211 = vector.load %arg3[%c1_82, %c1_83, %c0_84] : memref<2x8x96xf32, #tpu.memory_space<vmem>>, vector<1x1x32xf32>
    %212 = vector.shape_cast %211 : vector<1x1x32xf32> to vector<1x32xf32>
    %c1_85 = arith.constant 1 : index
    %c2_86 = arith.constant 2 : index
    %c0_87 = arith.constant 0 : index
    %213 = vector.load %arg3[%c1_85, %c2_86, %c0_87] : memref<2x8x96xf32, #tpu.memory_space<vmem>>, vector<1x1x64xf32>
    %214 = vector.shape_cast %213 : vector<1x1x64xf32> to vector<1x64xf32>
    %c1_88 = arith.constant 1 : index
    %c3_89 = arith.constant 3 : index
    %c0_90 = arith.constant 0 : index
    %215 = vector.load %arg3[%c1_88, %c3_89, %c0_90] : memref<2x8x96xf32, #tpu.memory_space<vmem>>, vector<1x1x32xf32>
    %216 = vector.shape_cast %215 : vector<1x1x32xf32> to vector<1x32xf32>
    %c1_91 = arith.constant 1 : index
    %c4_92 = arith.constant 4 : index
    %c0_93 = arith.constant 0 : index
    %217 = vector.load %arg3[%c1_91, %c4_92, %c0_93] : memref<2x8x96xf32, #tpu.memory_space<vmem>>, vector<1x1x32xf32>
    %218 = vector.shape_cast %217 : vector<1x1x32xf32> to vector<1x32xf32>
    %c1_94 = arith.constant 1 : index
    %c5_95 = arith.constant 5 : index
    %c0_96 = arith.constant 0 : index
    %219 = vector.load %arg3[%c1_94, %c5_95, %c0_96] : memref<2x8x96xf32, #tpu.memory_space<vmem>>, vector<1x1x32xf32>
    %220 = vector.shape_cast %219 : vector<1x1x32xf32> to vector<1x32xf32>
    %c1_97 = arith.constant 1 : index
    %c6_98 = arith.constant 6 : index
    %c0_99 = arith.constant 0 : index
    %221 = vector.load %arg3[%c1_97, %c6_98, %c0_99] : memref<2x8x96xf32, #tpu.memory_space<vmem>>, vector<1x1x32xf32>
    %222 = vector.shape_cast %221 : vector<1x1x32xf32> to vector<1x32xf32>
    %c1_100 = arith.constant 1 : index
    %c7_101 = arith.constant 7 : index
    %c0_102 = arith.constant 0 : index
    %223 = vector.load %arg3[%c1_100, %c7_101, %c0_102] : memref<2x8x96xf32, #tpu.memory_space<vmem>>, vector<1x1x32xf32>
    %224 = vector.shape_cast %223 : vector<1x1x32xf32> to vector<1x32xf32>
    %225 = arith.truncf %202 : vector<16x32xf32> to vector<16x32xbf16>
    %cst_103 = arith.constant dense<0.000000e+00> : vector<16x96xf32>
    %226 = tpu.matmul %225, %204, %cst_103 {dimension_numbers = #tpu.dot_dimension_numbers<[1], [0], [0], [1], [0, 0, 1, 1], [], []>} : vector<16x32xbf16>, vector<32x96xbf16>, vector<16x96xf32> -> vector<16x96xf32>
    %227 = vector.broadcast %210 : vector<1x96xf32> to vector<16x96xf32>
    %228 = arith.addf %226, %227 : vector<16x96xf32>
    %cst_104 = arith.constant 0.000000e+00 : f32
    %229 = vector.broadcast %cst_104 : f32 to vector<16x32xf32>
    %230 = vector.extract_strided_slice %228 {offsets = [0, 0], sizes = [16, 8], strides = [1, 1]} : vector<16x96xf32> to vector<16x8xf32>
    %231 = vector.shape_cast %230 : vector<16x8xf32> to vector<2x8x8xf32>
    %232 = arith.truncf %231 : vector<2x8x8xf32> to vector<2x8x8xbf16>
    %233 = vector.extract_strided_slice %228 {offsets = [0, 32], sizes = [16, 8], strides = [1, 1]} : vector<16x96xf32> to vector<16x8xf32>
    %234 = vector.shape_cast %233 : vector<16x8xf32> to vector<2x8x8xf32>
    %235 = arith.truncf %234 : vector<2x8x8xf32> to vector<2x8x8xbf16>
    %236 = vector.extract_strided_slice %228 {offsets = [0, 64], sizes = [16, 8], strides = [1, 1]} : vector<16x96xf32> to vector<16x8xf32>
    %237 = vector.shape_cast %236 : vector<16x8xf32> to vector<2x8x8xf32>
    %238 = arith.truncf %237 : vector<2x8x8xf32> to vector<2x8x8xbf16>
    "tpu.trace_start"() <{level = 10 : i32, message = "bqd,bkd->bqk"}> : () -> ()
    %cst_105 = arith.constant dense<0.000000e+00> : vector<2x8x8xf32>
    %239 = tpu.matmul %232, %235, %cst_105 {dimension_numbers = #tpu.dot_dimension_numbers<[2], [2], [1], [1], [0, 0, 0, 1, 1, 1], [0], [0]>} : vector<2x8x8xbf16>, vector<2x8x8xbf16>, vector<2x8x8xf32> -> vector<2x8x8xf32>
    "tpu.trace_stop"() : () -> ()
    %240 = arith.addf %239, %1 : vector<2x8x8xf32>
    %cst_106 = arith.constant dense<0xFF800000> : vector<2x8xf32>
    %241 = vector.multi_reduction <maximumf>, %240, %cst_106 [2] : vector<2x8x8xf32> to vector<2x8xf32>
    %242 = vector.shape_cast %241 : vector<2x8xf32> to vector<2x8x1xf32>
    %243 = vector.broadcast %242 : vector<2x8x1xf32> to vector<2x8x8xf32>
    %244 = arith.subf %240, %243 : vector<2x8x8xf32>
    %245 = math.exp %244 : vector<2x8x8xf32>
    %cst_107 = arith.constant dense<0.000000e+00> : vector<2x8xf32>
    %246 = vector.multi_reduction <add>, %245, %cst_107 [2] : vector<2x8x8xf32> to vector<2x8xf32>
    %247 = vector.shape_cast %246 : vector<2x8xf32> to vector<2x8x1xf32>
    %248 = tpu.reciprocal %247 {approx = true} : vector<2x8x1xf32> -> vector<2x8x1xf32>
    %249 = vector.broadcast %248 : vector<2x8x1xf32> to vector<2x8x8xf32>
    %250 = arith.mulf %245, %249 : vector<2x8x8xf32>
    %251 = arith.truncf %250 : vector<2x8x8xf32> to vector<2x8x8xbf16>
    "tpu.trace_start"() <{level = 10 : i32, message = "bqk,bkd->bqd"}> : () -> ()
    %cst_108 = arith.constant dense<0.000000e+00> : vector<2x8x8xf32>
    %252 = tpu.matmul %251, %238, %cst_108 {dimension_numbers = #tpu.dot_dimension_numbers<[2], [1], [1], [2], [0, 0, 0, 1, 1, 2], [0], [0]>} : vector<2x8x8xbf16>, vector<2x8x8xbf16>, vector<2x8x8xf32> -> vector<2x8x8xf32>
    "tpu.trace_stop"() : () -> ()
    %c1_109 = arith.constant 1 : index
    %c32_110 = arith.constant 32 : index
    %c0_111 = arith.constant 0 : index
    %253 = vector.load %arg2[%c1_109, %c32_110, %c0_111] : memref<2x192x96xbf16, #tpu.memory_space<vmem>>, vector<1x8x32xbf16>
    %254 = vector.shape_cast %253 : vector<1x8x32xbf16> to vector<8x32xbf16>
    %255 = vector.shape_cast %252 : vector<2x8x8xf32> to vector<16x8xf32>
    %256 = arith.truncf %255 : vector<16x8xf32> to vector<16x8xbf16>
    %cst_112 = arith.constant dense<0.000000e+00> : vector<16x32xf32>
    %257 = tpu.matmul %256, %254, %cst_112 {dimension_numbers = #tpu.dot_dimension_numbers<[1], [0], [0], [1], [0, 0, 1, 1], [], []>} : vector<16x8xbf16>, vector<8x32xbf16>, vector<16x32xf32> -> vector<16x32xf32>
    %258 = arith.addf %229, %257 : vector<16x32xf32>
    %259 = vector.extract_strided_slice %228 {offsets = [0, 8], sizes = [16, 8], strides = [1, 1]} : vector<16x96xf32> to vector<16x8xf32>
    %260 = vector.shape_cast %259 : vector<16x8xf32> to vector<2x8x8xf32>
    %261 = arith.truncf %260 : vector<2x8x8xf32> to vector<2x8x8xbf16>
    %262 = vector.extract_strided_slice %228 {offsets = [0, 40], sizes = [16, 8], strides = [1, 1]} : vector<16x96xf32> to vector<16x8xf32>
    %263 = vector.shape_cast %262 : vector<16x8xf32> to vector<2x8x8xf32>
    %264 = arith.truncf %263 : vector<2x8x8xf32> to vector<2x8x8xbf16>
    %265 = vector.extract_strided_slice %228 {offsets = [0, 72], sizes = [16, 8], strides = [1, 1]} : vector<16x96xf32> to vector<16x8xf32>
    %266 = vector.shape_cast %265 : vector<16x8xf32> to vector<2x8x8xf32>
    %267 = arith.truncf %266 : vector<2x8x8xf32> to vector<2x8x8xbf16>
    "tpu.trace_start"() <{level = 10 : i32, message = "bqd,bkd->bqk"}> : () -> ()
    %cst_113 = arith.constant dense<0.000000e+00> : vector<2x8x8xf32>
    %268 = tpu.matmul %261, %264, %cst_113 {dimension_numbers = #tpu.dot_dimension_numbers<[2], [2], [1], [1], [0, 0, 0, 1, 1, 1], [0], [0]>} : vector<2x8x8xbf16>, vector<2x8x8xbf16>, vector<2x8x8xf32> -> vector<2x8x8xf32>
    "tpu.trace_stop"() : () -> ()
    %269 = arith.addf %268, %1 : vector<2x8x8xf32>
    %cst_114 = arith.constant dense<0xFF800000> : vector<2x8xf32>
    %270 = vector.multi_reduction <maximumf>, %269, %cst_114 [2] : vector<2x8x8xf32> to vector<2x8xf32>
    %271 = vector.shape_cast %270 : vector<2x8xf32> to vector<2x8x1xf32>
    %272 = vector.broadcast %271 : vector<2x8x1xf32> to vector<2x8x8xf32>
    %273 = arith.subf %269, %272 : vector<2x8x8xf32>
    %274 = math.exp %273 : vector<2x8x8xf32>
    %cst_115 = arith.constant dense<0.000000e+00> : vector<2x8xf32>
    %275 = vector.multi_reduction <add>, %274, %cst_115 [2] : vector<2x8x8xf32> to vector<2x8xf32>
    %276 = vector.shape_cast %275 : vector<2x8xf32> to vector<2x8x1xf32>
    %277 = tpu.reciprocal %276 {approx = true} : vector<2x8x1xf32> -> vector<2x8x1xf32>
    %278 = vector.broadcast %277 : vector<2x8x1xf32> to vector<2x8x8xf32>
    %279 = arith.mulf %274, %278 : vector<2x8x8xf32>
    %280 = arith.truncf %279 : vector<2x8x8xf32> to vector<2x8x8xbf16>
    "tpu.trace_start"() <{level = 10 : i32, message = "bqk,bkd->bqd"}> : () -> ()
    %cst_116 = arith.constant dense<0.000000e+00> : vector<2x8x8xf32>
    %281 = tpu.matmul %280, %267, %cst_116 {dimension_numbers = #tpu.dot_dimension_numbers<[2], [1], [1], [2], [0, 0, 0, 1, 1, 2], [0], [0]>} : vector<2x8x8xbf16>, vector<2x8x8xbf16>, vector<2x8x8xf32> -> vector<2x8x8xf32>
    "tpu.trace_stop"() : () -> ()
    %c1_117 = arith.constant 1 : index
    %c48_118 = arith.constant 48 : index
    %c0_119 = arith.constant 0 : index
    %282 = vector.load %arg2[%c1_117, %c48_118, %c0_119] : memref<2x192x96xbf16, #tpu.memory_space<vmem>>, vector<1x8x32xbf16>
    %283 = vector.shape_cast %282 : vector<1x8x32xbf16> to vector<8x32xbf16>
    %284 = vector.shape_cast %281 : vector<2x8x8xf32> to vector<16x8xf32>
    %285 = arith.truncf %284 : vector<16x8xf32> to vector<16x8xbf16>
    %cst_120 = arith.constant dense<0.000000e+00> : vector<16x32xf32>
    %286 = tpu.matmul %285, %283, %cst_120 {dimension_numbers = #tpu.dot_dimension_numbers<[1], [0], [0], [1], [0, 0, 1, 1], [], []>} : vector<16x8xbf16>, vector<8x32xbf16>, vector<16x32xf32> -> vector<16x32xf32>
    %287 = arith.addf %258, %286 : vector<16x32xf32>
    %288 = vector.extract_strided_slice %228 {offsets = [0, 16], sizes = [16, 8], strides = [1, 1]} : vector<16x96xf32> to vector<16x8xf32>
    %289 = vector.shape_cast %288 : vector<16x8xf32> to vector<2x8x8xf32>
    %290 = arith.truncf %289 : vector<2x8x8xf32> to vector<2x8x8xbf16>
    %291 = vector.extract_strided_slice %228 {offsets = [0, 48], sizes = [16, 8], strides = [1, 1]} : vector<16x96xf32> to vector<16x8xf32>
    %292 = vector.shape_cast %291 : vector<16x8xf32> to vector<2x8x8xf32>
    %293 = arith.truncf %292 : vector<2x8x8xf32> to vector<2x8x8xbf16>
    %294 = vector.extract_strided_slice %228 {offsets = [0, 80], sizes = [16, 8], strides = [1, 1]} : vector<16x96xf32> to vector<16x8xf32>
    %295 = vector.shape_cast %294 : vector<16x8xf32> to vector<2x8x8xf32>
    %296 = arith.truncf %295 : vector<2x8x8xf32> to vector<2x8x8xbf16>
    "tpu.trace_start"() <{level = 10 : i32, message = "bqd,bkd->bqk"}> : () -> ()
    %cst_121 = arith.constant dense<0.000000e+00> : vector<2x8x8xf32>
    %297 = tpu.matmul %290, %293, %cst_121 {dimension_numbers = #tpu.dot_dimension_numbers<[2], [2], [1], [1], [0, 0, 0, 1, 1, 1], [0], [0]>} : vector<2x8x8xbf16>, vector<2x8x8xbf16>, vector<2x8x8xf32> -> vector<2x8x8xf32>
    "tpu.trace_stop"() : () -> ()
    %298 = arith.addf %297, %1 : vector<2x8x8xf32>
    %cst_122 = arith.constant dense<0xFF800000> : vector<2x8xf32>
    %299 = vector.multi_reduction <maximumf>, %298, %cst_122 [2] : vector<2x8x8xf32> to vector<2x8xf32>
    %300 = vector.shape_cast %299 : vector<2x8xf32> to vector<2x8x1xf32>
    %301 = vector.broadcast %300 : vector<2x8x1xf32> to vector<2x8x8xf32>
    %302 = arith.subf %298, %301 : vector<2x8x8xf32>
    %303 = math.exp %302 : vector<2x8x8xf32>
    %cst_123 = arith.constant dense<0.000000e+00> : vector<2x8xf32>
    %304 = vector.multi_reduction <add>, %303, %cst_123 [2] : vector<2x8x8xf32> to vector<2x8xf32>
    %305 = vector.shape_cast %304 : vector<2x8xf32> to vector<2x8x1xf32>
    %306 = tpu.reciprocal %305 {approx = true} : vector<2x8x1xf32> -> vector<2x8x1xf32>
    %307 = vector.broadcast %306 : vector<2x8x1xf32> to vector<2x8x8xf32>
    %308 = arith.mulf %303, %307 : vector<2x8x8xf32>
    %309 = arith.truncf %308 : vector<2x8x8xf32> to vector<2x8x8xbf16>
    "tpu.trace_start"() <{level = 10 : i32, message = "bqk,bkd->bqd"}> : () -> ()
    %cst_124 = arith.constant dense<0.000000e+00> : vector<2x8x8xf32>
    %310 = tpu.matmul %309, %296, %cst_124 {dimension_numbers = #tpu.dot_dimension_numbers<[2], [1], [1], [2], [0, 0, 0, 1, 1, 2], [0], [0]>} : vector<2x8x8xbf16>, vector<2x8x8xbf16>, vector<2x8x8xf32> -> vector<2x8x8xf32>
    "tpu.trace_stop"() : () -> ()
    %c1_125 = arith.constant 1 : index
    %c64_126 = arith.constant 64 : index
    %c0_127 = arith.constant 0 : index
    %311 = vector.load %arg2[%c1_125, %c64_126, %c0_127] : memref<2x192x96xbf16, #tpu.memory_space<vmem>>, vector<1x8x32xbf16>
    %312 = vector.shape_cast %311 : vector<1x8x32xbf16> to vector<8x32xbf16>
    %313 = vector.shape_cast %310 : vector<2x8x8xf32> to vector<16x8xf32>
    %314 = arith.truncf %313 : vector<16x8xf32> to vector<16x8xbf16>
    %cst_128 = arith.constant dense<0.000000e+00> : vector<16x32xf32>
    %315 = tpu.matmul %314, %312, %cst_128 {dimension_numbers = #tpu.dot_dimension_numbers<[1], [0], [0], [1], [0, 0, 1, 1], [], []>} : vector<16x8xbf16>, vector<8x32xbf16>, vector<16x32xf32> -> vector<16x32xf32>
    %316 = arith.addf %287, %315 : vector<16x32xf32>
    %317 = vector.extract_strided_slice %228 {offsets = [0, 24], sizes = [16, 8], strides = [1, 1]} : vector<16x96xf32> to vector<16x8xf32>
    %318 = vector.shape_cast %317 : vector<16x8xf32> to vector<2x8x8xf32>
    %319 = arith.truncf %318 : vector<2x8x8xf32> to vector<2x8x8xbf16>
    %320 = vector.extract_strided_slice %228 {offsets = [0, 56], sizes = [16, 8], strides = [1, 1]} : vector<16x96xf32> to vector<16x8xf32>
    %321 = vector.shape_cast %320 : vector<16x8xf32> to vector<2x8x8xf32>
    %322 = arith.truncf %321 : vector<2x8x8xf32> to vector<2x8x8xbf16>
    %323 = vector.extract_strided_slice %228 {offsets = [0, 88], sizes = [16, 8], strides = [1, 1]} : vector<16x96xf32> to vector<16x8xf32>
    %324 = vector.shape_cast %323 : vector<16x8xf32> to vector<2x8x8xf32>
    %325 = arith.truncf %324 : vector<2x8x8xf32> to vector<2x8x8xbf16>
    "tpu.trace_start"() <{level = 10 : i32, message = "bqd,bkd->bqk"}> : () -> ()
    %cst_129 = arith.constant dense<0.000000e+00> : vector<2x8x8xf32>
    %326 = tpu.matmul %319, %322, %cst_129 {dimension_numbers = #tpu.dot_dimension_numbers<[2], [2], [1], [1], [0, 0, 0, 1, 1, 1], [0], [0]>} : vector<2x8x8xbf16>, vector<2x8x8xbf16>, vector<2x8x8xf32> -> vector<2x8x8xf32>
    "tpu.trace_stop"() : () -> ()
    %327 = arith.addf %326, %1 : vector<2x8x8xf32>
    %cst_130 = arith.constant dense<0xFF800000> : vector<2x8xf32>
    %328 = vector.multi_reduction <maximumf>, %327, %cst_130 [2] : vector<2x8x8xf32> to vector<2x8xf32>
    %329 = vector.shape_cast %328 : vector<2x8xf32> to vector<2x8x1xf32>
    %330 = vector.broadcast %329 : vector<2x8x1xf32> to vector<2x8x8xf32>
    %331 = arith.subf %327, %330 : vector<2x8x8xf32>
    %332 = math.exp %331 : vector<2x8x8xf32>
    %cst_131 = arith.constant dense<0.000000e+00> : vector<2x8xf32>
    %333 = vector.multi_reduction <add>, %332, %cst_131 [2] : vector<2x8x8xf32> to vector<2x8xf32>
    %334 = vector.shape_cast %333 : vector<2x8xf32> to vector<2x8x1xf32>
    %335 = tpu.reciprocal %334 {approx = true} : vector<2x8x1xf32> -> vector<2x8x1xf32>
    %336 = vector.broadcast %335 : vector<2x8x1xf32> to vector<2x8x8xf32>
    %337 = arith.mulf %332, %336 : vector<2x8x8xf32>
    %338 = arith.truncf %337 : vector<2x8x8xf32> to vector<2x8x8xbf16>
    "tpu.trace_start"() <{level = 10 : i32, message = "bqk,bkd->bqd"}> : () -> ()
    %cst_132 = arith.constant dense<0.000000e+00> : vector<2x8x8xf32>
    %339 = tpu.matmul %338, %325, %cst_132 {dimension_numbers = #tpu.dot_dimension_numbers<[2], [1], [1], [2], [0, 0, 0, 1, 1, 2], [0], [0]>} : vector<2x8x8xbf16>, vector<2x8x8xbf16>, vector<2x8x8xf32> -> vector<2x8x8xf32>
    "tpu.trace_stop"() : () -> ()
    %c1_133 = arith.constant 1 : index
    %c80_134 = arith.constant 80 : index
    %c0_135 = arith.constant 0 : index
    %340 = vector.load %arg2[%c1_133, %c80_134, %c0_135] : memref<2x192x96xbf16, #tpu.memory_space<vmem>>, vector<1x8x32xbf16>
    %341 = vector.shape_cast %340 : vector<1x8x32xbf16> to vector<8x32xbf16>
    %342 = vector.shape_cast %339 : vector<2x8x8xf32> to vector<16x8xf32>
    %343 = arith.truncf %342 : vector<16x8xf32> to vector<16x8xbf16>
    %cst_136 = arith.constant dense<0.000000e+00> : vector<16x32xf32>
    %344 = tpu.matmul %343, %341, %cst_136 {dimension_numbers = #tpu.dot_dimension_numbers<[1], [0], [0], [1], [0, 0, 1, 1], [], []>} : vector<16x8xbf16>, vector<8x32xbf16>, vector<16x32xf32> -> vector<16x32xf32>
    %345 = arith.addf %316, %344 : vector<16x32xf32>
    %346 = arith.addf %202, %345 : vector<16x32xf32>
    %347 = vector.broadcast %212 : vector<1x32xf32> to vector<16x32xf32>
    %348 = arith.addf %346, %347 : vector<16x32xf32>
    %cst_137 = arith.constant dense<0.000000e+00> : vector<16xf32>
    %349 = vector.multi_reduction <add>, %348, %cst_137 [1] : vector<16x32xf32> to vector<16xf32>
    %350 = vector.shape_cast %349 : vector<16xf32> to vector<16x1xf32>
    %cst_138 = arith.constant 3.200000e+01 : f32
    %351 = vector.broadcast %cst_138 : f32 to vector<16x1xf32>
    %352 = arith.divf %350, %351 : vector<16x1xf32>
    %353 = vector.broadcast %352 : vector<16x1xf32> to vector<16x32xf32>
    %354 = arith.subf %348, %353 : vector<16x32xf32>
    %355 = arith.mulf %354, %354 : vector<16x32xf32>
    %cst_139 = arith.constant dense<0.000000e+00> : vector<16xf32>
    %356 = vector.multi_reduction <add>, %355, %cst_139 [1] : vector<16x32xf32> to vector<16xf32>
    %357 = vector.shape_cast %356 : vector<16xf32> to vector<16x1xf32>
    %cst_140 = arith.constant 3.200000e+01 : f32
    %358 = vector.broadcast %cst_140 : f32 to vector<16x1xf32>
    %359 = arith.divf %357, %358 : vector<16x1xf32>
    %360 = vector.broadcast %352 : vector<16x1xf32> to vector<16x32xf32>
    %361 = arith.subf %348, %360 : vector<16x32xf32>
    %cst_141 = arith.constant 9.99999974E-6 : f32
    %362 = vector.broadcast %cst_141 : f32 to vector<16x1xf32>
    %363 = arith.addf %359, %362 : vector<16x1xf32>
    %364 = math.rsqrt %363 : vector<16x1xf32>
    %365 = vector.broadcast %364 : vector<16x1xf32> to vector<16x32xf32>
    %366 = arith.mulf %361, %365 : vector<16x32xf32>
    %367 = vector.broadcast %218 : vector<1x32xf32> to vector<16x32xf32>
    %368 = arith.mulf %366, %367 : vector<16x32xf32>
    %369 = vector.broadcast %220 : vector<1x32xf32> to vector<16x32xf32>
    %370 = arith.addf %368, %369 : vector<16x32xf32>
    %371 = arith.truncf %370 : vector<16x32xf32> to vector<16x32xbf16>
    %cst_142 = arith.constant dense<0.000000e+00> : vector<16x64xf32>
    %372 = tpu.matmul %371, %206, %cst_142 {dimension_numbers = #tpu.dot_dimension_numbers<[1], [0], [0], [1], [0, 0, 1, 1], [], []>} : vector<16x32xbf16>, vector<32x64xbf16>, vector<16x64xf32> -> vector<16x64xf32>
    %373 = vector.broadcast %214 : vector<1x64xf32> to vector<16x64xf32>
    %374 = arith.addf %372, %373 : vector<16x64xf32>
    %cst_143 = arith.constant 0.000000e+00 : f32
    %375 = vector.broadcast %cst_143 : f32 to vector<16x64xf32>
    %376 = arith.maximumf %374, %375 : vector<16x64xf32>
    %377 = arith.truncf %376 : vector<16x64xf32> to vector<16x64xbf16>
    %cst_144 = arith.constant dense<0.000000e+00> : vector<16x32xf32>
    %378 = tpu.matmul %377, %208, %cst_144 {dimension_numbers = #tpu.dot_dimension_numbers<[1], [0], [0], [1], [0, 0, 1, 1], [], []>} : vector<16x64xbf16>, vector<64x32xbf16>, vector<16x32xf32> -> vector<16x32xf32>
    %379 = vector.broadcast %216 : vector<1x32xf32> to vector<16x32xf32>
    %380 = arith.addf %378, %379 : vector<16x32xf32>
    %381 = arith.addf %370, %380 : vector<16x32xf32>
    %cst_145 = arith.constant dense<0.000000e+00> : vector<16xf32>
    %382 = vector.multi_reduction <add>, %381, %cst_145 [1] : vector<16x32xf32> to vector<16xf32>
    %383 = vector.shape_cast %382 : vector<16xf32> to vector<16x1xf32>
    %cst_146 = arith.constant 3.200000e+01 : f32
    %384 = vector.broadcast %cst_146 : f32 to vector<16x1xf32>
    %385 = arith.divf %383, %384 : vector<16x1xf32>
    %386 = vector.broadcast %385 : vector<16x1xf32> to vector<16x32xf32>
    %387 = arith.subf %381, %386 : vector<16x32xf32>
    %388 = arith.mulf %387, %387 : vector<16x32xf32>
    %cst_147 = arith.constant dense<0.000000e+00> : vector<16xf32>
    %389 = vector.multi_reduction <add>, %388, %cst_147 [1] : vector<16x32xf32> to vector<16xf32>
    %390 = vector.shape_cast %389 : vector<16xf32> to vector<16x1xf32>
    %cst_148 = arith.constant 3.200000e+01 : f32
    %391 = vector.broadcast %cst_148 : f32 to vector<16x1xf32>
    %392 = arith.divf %390, %391 : vector<16x1xf32>
    %393 = vector.broadcast %385 : vector<16x1xf32> to vector<16x32xf32>
    %394 = arith.subf %381, %393 : vector<16x32xf32>
    %cst_149 = arith.constant 9.99999974E-6 : f32
    %395 = vector.broadcast %cst_149 : f32 to vector<16x1xf32>
    %396 = arith.addf %392, %395 : vector<16x1xf32>
    %397 = math.rsqrt %396 : vector<16x1xf32>
    %398 = vector.broadcast %397 : vector<16x1xf32> to vector<16x32xf32>
    %399 = arith.mulf %394, %398 : vector<16x32xf32>
    %400 = vector.broadcast %222 : vector<1x32xf32> to vector<16x32xf32>
    %401 = arith.mulf %399, %400 : vector<16x32xf32>
    %402 = vector.broadcast %224 : vector<1x32xf32> to vector<16x32xf32>
    %403 = arith.addf %401, %402 : vector<16x32xf32>
    %c0_150 = arith.constant 0 : index
    %c0_151 = arith.constant 0 : index
    %404 = vector.load %arg4[%c0_150, %c0_151] : memref<16x32xf32, #tpu.memory_space<vmem>>, vector<16x32xf32>
    tpu.vector_store %arg4[%c0_150, %c0_151], %403 {strides = array<i32>} : memref<16x32xf32, #tpu.memory_space<vmem>>, vector<16x32xf32>,
    return
  }
}

</mosaic_0001>

<llo_original>
// kernel: tpu_custom_call.1
$region0: #{tpu_custom_call.1}
  #allocation0 [shape = 'u32[]', space=smem, size = 0x4, offset = 0x4, fixed_abs, tag = 'smem constant byte address 0x4 - core index']
  #allocation1 [shape = 'u32[72,128]{1,0:T(1,128)}', space=vmem, size = 0x9000, scoped, tag = 'internal scratch']
  %s0 = inlined_call_operand.hbm [shape: f32[16,32], index: 0, kind: input, shape index: {}]
  %s1 = inlined_call_operand.hbm [shape: f32[2,8,8], index: 1, kind: input, shape index: {}]
  %s2 = inlined_call_operand.hbm [shape: bf16[2,192,96], index: 2, kind: input, shape index: {}]
  %s3 = inlined_call_operand.hbm [shape: f32[2,8,96], index: 3, kind: input, shape index: {}]
  %s4 = inlined_call_operand.hbm [shape: f32[16,32], index: 4, kind: output, shape index: {}]
  %s5 = sld [smem:[#allocation0]]
  $region42: #{tpu_custom_call.1} parent=0
    _
  %s7 = ssub.s32 1, %s5
  %s8 = scalar_select 0, %s7, %s5
  $region1: #{tpu_custom_call.1} parent=0
    #allocation2 [shape = 'u8[8192]{0}', space=vmem, size = 0x2000, scoped, tag = 'input window, operand 0, single buffered']
    #allocation3 [shape = 's32[1]{0}', space=sflag, size = 0x4, scoped, tag = 'scoped memory for tpu_custom_call.1']
    #allocation4 [shape = 's32[1]{0}', space=sflag, size = 0x4, scoped, tag = 'scoped memory for tpu_custom_call.1']
    #allocation5 [shape = 'u8[8192]{0}', space=vmem, size = 0x2000, scoped, tag = 'input window, operand 1, single buffered']
    #allocation6 [shape = 's32[1]{0}', space=sflag, size = 0x4, scoped, tag = 'scoped memory for tpu_custom_call.1']
    #allocation7 [shape = 'u8[98304]{0}', space=vmem, size = 0x18000, scoped, tag = 'input window, operand 2, single buffered']
    #allocation8 [shape = 'u8[8192]{0}', space=vmem, size = 0x2000, scoped, tag = 'input window, operand 3, single buffered']
    #allocation9 [shape = 's32[1]{0}', space=sflag, size = 0x4, scoped, tag = 'scoped memory for tpu_custom_call.1']
    #allocation10 [shape = 'u8[8192]{0}', space=vmem, size = 0x2000, scoped, tag = 'output window, operand 0, single buffered']
    %9 = vsyncpa [#allocation3], 0
    %10 = vsyncpa [#allocation6], 0
    %11 = vsyncpa [#allocation9], 0
    %12 = vsyncpa [#allocation4], 0
    // Predicated region
    $region2: #{tpu_custom_call.1} parent=1 // pred_check
      _
    $region3: #{tpu_custom_call.1} parent=1 // pred_check_branch
      %14 = sbr.rel (0) target = $region5
    $region4: #{tpu_custom_call.1} parent=1 // pred_region
      %16 = vsyncadd [#allocation3], 0
      %s17 = sshll.u32 %s0, 4
      %s18 = int_to_ptr.hbm [resolvable:$true] %s17
      %s19 = sshll.u32 [#allocation2], 4
      %s20 = int_to_ptr.vmem [resolvable:$true] %s19
      %25 = dma.hbm_to_vmem [thread:$0]  %s18, 256, %s20, [#allocation3], 128, 128, 8
    $region5: #{tpu_custom_call.1} parent=1 // pred_fallthru
      _
    // Predicated region
    $region6: #{tpu_custom_call.1} parent=1 // pred_check
      _
    $region7: #{tpu_custom_call.1} parent=1 // pred_check_branch
      %27 = sbr.rel (0) target = $region9
    $region8: #{tpu_custom_call.1} parent=1 // pred_region
      %29 = vsyncadd [#allocation6], 0
      %s30 = sshll.u32 %s1, 4
      %s31 = int_to_ptr.hbm [resolvable:$true] %s30
      %s32 = sshll.u32 [#allocation5], 4
      %s33 = int_to_ptr.vmem [resolvable:$true] %s32
      %38 = dma.hbm_to_vmem [thread:$0]  %s31, 256, %s33, [#allocation6], 128, 128, 8
    $region9: #{tpu_custom_call.1} parent=1 // pred_fallthru
      _
    // Predicated region
    $region10: #{tpu_custom_call.1} parent=1 // pred_check
      _
    $region11: #{tpu_custom_call.1} parent=1 // pred_check_branch
      %40 = sbr.rel (0) target = $region13
    $region12: #{tpu_custom_call.1} parent=1 // pred_region
      %42 = vsyncadd [#allocation6], 0
      %s43 = sshll.u32 %s2, 4
      %s44 = int_to_ptr.hbm [resolvable:$true] %s43
      %s45 = sshll.u32 [#allocation7], 4
      %s46 = int_to_ptr.vmem [resolvable:$true] %s45
      %51 = dma.hbm_to_vmem [thread:$0]  %s44, 3072, %s46, [#allocation6], 64, 64, 4
    $region13: #{tpu_custom_call.1} parent=1 // pred_fallthru
      _
    // Predicated region
    $region14: #{tpu_custom_call.1} parent=1 // pred_check
      _
    $region15: #{tpu_custom_call.1} parent=1 // pred_check_branch
      %53 = sbr.rel (0) target = $region17
    $region16: #{tpu_custom_call.1} parent=1 // pred_region
      %55 = vsyncadd [#allocation9], 0
      %s56 = sshll.u32 %s3, 4
      %s57 = int_to_ptr.hbm [resolvable:$true] %s56
      %s58 = sshll.u32 [#allocation8], 4
      %s59 = int_to_ptr.vmem [resolvable:$true] %s58
      %64 = dma.hbm_to_vmem [thread:$0]  %s57, 256, %s59, [#allocation9], 128, 128, 8
    $region17: #{tpu_custom_call.1} parent=1 // pred_fallthru
      _
    // Predicated region
    $region18: #{tpu_custom_call.1} parent=1 // pred_check
      _
    $region19: #{tpu_custom_call.1} parent=1 // pred_check_branch
      %66 = sbr.rel (0) target = $region21
    $region20: #{tpu_custom_call.1} parent=1 // pred_region
      %68 = dma.done [#allocation3], 256
    $region21: #{tpu_custom_call.1} parent=1 // pred_fallthru
      _
    // Predicated region
    $region22: #{tpu_custom_call.1} parent=1 // pred_check
      _
    $region23: #{tpu_custom_call.1} parent=1 // pred_check_branch
      %70 = sbr.rel (0) target = $region25
    $region24: #{tpu_custom_call.1} parent=1 // pred_region
      %72 = dma.done [#allocation6], 256
    $region25: #{tpu_custom_call.1} parent=1 // pred_fallthru
      _
    // Predicated region
    $region26: #{tpu_custom_call.1} parent=1 // pred_check
      _
    $region27: #{tpu_custom_call.1} parent=1 // pred_check_branch
      %74 = sbr.rel (0) target = $region29
    $region28: #{tpu_custom_call.1} parent=1 // pred_region
      %76 = dma.done [#allocation6], 3072
    $region29: #{tpu_custom_call.1} parent=1 // pred_fallthru
      _
    // Predicated region
    $region30: #{tpu_custom_call.1} parent=1 // pred_check
      _
    $region31: #{tpu_custom_call.1} parent=1 // pred_check_branch
      %78 = sbr.rel (0) target = $region33
    $region32: #{tpu_custom_call.1} parent=1 // pred_region
      %80 = dma.done [#allocation9], 256
    $region33: #{tpu_custom_call.1} parent=1 // pred_fallthru
      _
    %v82 = vld [vmem:[#allocation2] sm:$0xff]
    %v83 = vld [vmem:[#allocation2 + $0x8] sm:$0xff]
    %v84 = vld [vmem:[#allocation5] sm:$0xff]
    %v85 = vld [vmem:[#allocation5 + $0x8] sm:$0xff]
    %v86 = vld [vmem:[#allocation7] sm:$0xf]
    %v87 = vld [vmem:[#allocation7 + $0x4] sm:$0xf]
    %v88 = vld [vmem:[#allocation7 + $0x8] sm:$0xf]
    %v89 = vld [vmem:[#allocation7 + $0xc] sm:$0xf]
    %v90 = vld [vmem:[#allocation7 + $0x30] sm:$0xf]
    %v91 = vld [vmem:[#allocation7 + $0x34] sm:$0xf]
    %v92 = vld [vmem:[#allocation7 + $0x38] sm:$0xf]
    %v93 = vld [vmem:[#allocation7 + $0x3c] sm:$0xf]
    %v94 = vld [vmem:[#allocation7 + $0x40] sm:$0xf]
    %v95 = vld [vmem:[#allocation7 + $0x44] sm:$0xf]
    %v96 = vld [vmem:[#allocation7 + $0x48] sm:$0xf]
    %v97 = vld [vmem:[#allocation7 + $0x4c] sm:$0xf]
    %v98 = vld [vmem:[#allocation7 + $0x50] sm:$0xf]
    %v99 = vld [vmem:[#allocation7 + $0x54] sm:$0xf]
    %v100 = vld [vmem:[#allocation7 + $0x58] sm:$0xf]
    %v101 = vld [vmem:[#allocation7 + $0x5c] sm:$0xf]
    %v102 = vld [vmem:[#allocation8] sm:$0x1]
    %v103 = vld [vmem:[#allocation8 + $0x1] sm:$0x1]
    %v104 = vld [vmem:[#allocation8 + $0x2] sm:$0x1]
    %v105 = vld [vmem:[#allocation8 + $0x3] sm:$0x1]
    %v106 = vld [vmem:[#allocation8 + $0x4] sm:$0x1]
    %v107 = vld [vmem:[#allocation8 + $0x5] sm:$0x1]
    %v108 = vld [vmem:[#allocation8 + $0x6] sm:$0x1]
    %v109 = vld [vmem:[#allocation8 + $0x7] sm:$0x1]
    %v110 = vpack.c.bf16 %v83, %v82
    %v111 = vperm.slane %v102, 0
    %v116 = vunpack.c.l.b16 %v86
    %v117 = vunpack.c.l.b16 %v87
    %v118 = vunpack.c.l.b16 %v88
    %v119 = vunpack.c.l.b16 %v89
    %v120 = vpack.c.b16 %v117, %v116
    %v121 = vpack.c.b16 %v119, %v118
    %vm124 = vcmask 261120
    %v126 = vsel %vm124, %v110, 0
    %128 = vmatpush.bf16.msra.mxu0 0
    %129 = vmatpush.bf16.msra.mxu0 0
    %130 = vmatpush.bf16.msra.mxu0 0
    %131 = vmatpush.bf16.msra.mxu0 0
    %132 = vmatpush.bf16.msra.mxu0 0
    %133 = vmatpush.bf16.msra.mxu0 0
    %134 = vmatpush.bf16.msra.mxu0 %v121
    %135 = vmatpush.bf16.msra.mxu0 %v120
    %136 = vmatmul.bf16.gmra.mxu0 %v126
    %v137 = vpop.f32.mrf.mxu0
    %v138 = vadd.f32 %v111, %v137
    %v139 = vpop.f32.mrf.mxu0
    %v140 = vadd.f32 %v111, %v139
    %141 = vdwg.mxu0
    %v142 = vpack.c.bf16 %v138, %v138
    %v143 = vpack.c.bf16 %v140, %v140
    %v145 = vunpack.c.l.b16 %v142
    %v146 = vpack.c.b16 %v145, %v145
    %147 = vrot.lane.b32.xlu0 %v146, 96
    %v148 = vpop.permute.xlu0 %147
    %vm149 = vcmask 64512
    %v151 = vsel %vm149, %v142, 0
    %v154 = vsel %vm149, %v148, 0
    %156 = vmatpush.bf16.xpose.msra.mxu0 0
    %157 = vmatpush.bf16.xpose.msra.mxu0 0
    %158 = vmatpush.bf16.xpose.msra.mxu0 0
    %159 = vmatpush.bf16.xpose.msra.mxu0 0
    %160 = vmatpush.bf16.xpose.msra.mxu0 0
    %161 = vmatpush.bf16.xpose.msra.mxu0 0
    %162 = vmatpush.bf16.xpose.msra.mxu0 0
    %163 = vmatpush.bf16.xpose.msra.mxu0 %v154
    %164 = vmatmul.bf16.gmra.mxu0 %v151
    %v165 = vpop.f32.mrf.mxu0
    %v166 = vadd.f32 %v84, %v165
    %v167 = vpop.f32.mrf.mxu0
    %168 = vdwg.mxu0
    %v170 = vunpack.c.l.b16 %v143
    %v171 = vpack.c.b16 %v170, %v170
    %172 = vrot.lane.b32.xlu0 %v171, 96
    %v173 = vpop.permute.xlu0 %172
    %v175 = vsel %vm149, %v143, 0
    %v178 = vsel %vm149, %v173, 0
    %180 = vmatpush.bf16.xpose.msra.mxu0 0
    %181 = vmatpush.bf16.xpose.msra.mxu0 0
    %182 = vmatpush.bf16.xpose.msra.mxu0 0
    %183 = vmatpush.bf16.xpose.msra.mxu0 0
    %184 = vmatpush.bf16.xpose.msra.mxu0 0
    %185 = vmatpush.bf16.xpose.msra.mxu0 0
    %186 = vmatpush.bf16.xpose.msra.mxu0 0
    %187 = vmatpush.bf16.xpose.msra.mxu0 %v178
    %188 = vmatmul.bf16.gmra.mxu0 %v175
    %v189 = vpop.f32.mrf.mxu0
    %v190 = vadd.f32 %v85, %v189
    %v191 = vpop.f32.mrf.mxu0
    %192 = vdwg.mxu0
    %v193 = vsel %vm149, %v166, -inf
    %194 = vmax.xlane.f32.xlu0 %v193
    %v195 = vpop.xlane.xlu0 %194
    %v196 = vsel %vm149, %v190, -inf
    %197 = vmax.xlane.f32.xlu0 %v196
    %v198 = vpop.xlane.xlu0 %197
    %v199 = vsub.f32 %v166, %v195
    %v200 = vsub.f32 %v190, %v198
    %v201 = vmul.f32 %v199, 1.442695
    %v202 = vpow.pop %v201
    %v203 = vmul.f32 %v200, 1.442695
    %v204 = vpow.pop %v203
    %v205 = vsel %vm149, %v202, 0.0
    %206 = vadd.xlane.f32.xlu0 %v205
    %v207 = vpop.xlane.xlu0 %206
    %v208 = vsel %vm149, %v204, 0.0
    %209 = vadd.xlane.f32.xlu0 %v208
    %v210 = vpop.xlane.xlu0 %209
    %v211 = vrcp.pop %v207
    %v212 = vrcp.pop %v210
    %v213 = vmul.f32 %v202, %v211
    %v214 = vmul.f32 %v204, %v212
    %v215 = vpack.c.bf16 %v213, %v213
    %v216 = vpack.c.bf16 %v214, %v214
    %217 = vrot.lane.b32.xlu0 %v146, 64
    %v218 = vpop.permute.xlu0 %217
    %v220 = vsel %vm149, %v215, 0
    %vm222 = vcmask 1043456
    %v224 = vsel %vm222, %v218, 0
    %226 = vmatpush.bf16.msra.mxu0 0
    %227 = vmatpush.bf16.msra.mxu0 0
    %228 = vmatpush.bf16.msra.mxu0 0
    %229 = vmatpush.bf16.msra.mxu0 0
    %230 = vmatpush.bf16.msra.mxu0 0
    %231 = vmatpush.bf16.msra.mxu0 0
    %232 = vmatpush.bf16.msra.mxu0 0
    %233 = vmatpush.bf16.msra.mxu0 %v224
    %234 = vmatmul.bf16.gmra.mxu0 %v220
    %v235 = vpop.f32.mrf.mxu0
    %v236 = vadd.f32 0.0, %v235
    %v237 = vpop.f32.mrf.mxu0
    %238 = vdwg.mxu0
    %239 = vrot.lane.b32.xlu0 %v171, 64
    %v240 = vpop.permute.xlu0 %239
    %v242 = vsel %vm149, %v216, 0
    %v245 = vsel %vm222, %v240, 0
    %247 = vmatpush.bf16.msra.mxu0 0
    %248 = vmatpush.bf16.msra.mxu0 0
    %249 = vmatpush.bf16.msra.mxu0 0
    %250 = vmatpush.bf16.msra.mxu0 0
    %251 = vmatpush.bf16.msra.mxu0 0
    %252 = vmatpush.bf16.msra.mxu0 0
    %253 = vmatpush.bf16.msra.mxu0 0
    %254 = vmatpush.bf16.msra.mxu0 %v245
    %255 = vmatmul.bf16.gmra.mxu0 %v242
    %v256 = vpop.f32.mrf.mxu0
    %v257 = vadd.f32 0.0, %v256
    %v258 = vpop.f32.mrf.mxu0
    %259 = vdwg.mxu0
    %v260 = vld [vmem:[#allocation7 + $0x10] sm:$0xf]
    %v261 = vpack.c.bf16 %v257, %v236
    %262 = vrot.lane.b32.xlu0 %v146, 120
    %v263 = vpop.permute.xlu0 %262
    %264 = vrot.lane.b32.xlu0 %v146, 88
    %v265 = vpop.permute.xlu0 %264
    %v267 = vsel %vm149, %v263, 0
    %v270 = vsel %vm149, %v265, 0
    %272 = vmatpush.bf16.xpose.msra.mxu0 0
    %273 = vmatpush.bf16.xpose.msra.mxu0 0
    %274 = vmatpush.bf16.xpose.msra.mxu0 0
    %275 = vmatpush.bf16.xpose.msra.mxu0 0
    %276 = vmatpush.bf16.xpose.msra.mxu0 0
    %277 = vmatpush.bf16.xpose.msra.mxu0 0
    %278 = vmatpush.bf16.xpose.msra.mxu0 0
    %279 = vmatpush.bf16.xpose.msra.mxu0 %v270
    %280 = vmatmul.bf16.gmra.mxu0 %v267
    %v281 = vpop.f32.mrf.mxu0
    %v282 = vadd.f32 %v84, %v281
    %v283 = vpop.f32.mrf.mxu0
    %284 = vdwg.mxu0
    %285 = vrot.lane.b32.xlu0 %v171, 120
    %v286 = vpop.permute.xlu0 %285
    %287 = vrot.lane.b32.xlu0 %v171, 88
    %v288 = vpop.permute.xlu0 %287
    %v290 = vsel %vm149, %v286, 0
    %v293 = vsel %vm149, %v288, 0
    %295 = vmatpush.bf16.xpose.msra.mxu0 0
    %296 = vmatpush.bf16.xpose.msra.mxu0 0
    %297 = vmatpush.bf16.xpose.msra.mxu0 0
    %298 = vmatpush.bf16.xpose.msra.mxu0 0
    %299 = vmatpush.bf16.xpose.msra.mxu0 0
    %300 = vmatpush.bf16.xpose.msra.mxu0 0
    %301 = vmatpush.bf16.xpose.msra.mxu0 0
    %302 = vmatpush.bf16.xpose.msra.mxu0 %v293
    %303 = vmatmul.bf16.gmra.mxu0 %v290
    %v304 = vpop.f32.mrf.mxu0
    %v305 = vadd.f32 %v85, %v304
    %v306 = vpop.f32.mrf.mxu0
    %307 = vdwg.mxu0
    %v308 = vsel %vm149, %v282, -inf
    %309 = vmax.xlane.f32.xlu0 %v308
    %v310 = vpop.xlane.xlu0 %309
    %v311 = vsel %vm149, %v305, -inf
    %312 = vmax.xlane.f32.xlu0 %v311
    %v313 = vpop.xlane.xlu0 %312
    %v314 = vsub.f32 %v282, %v310
    %v315 = vsub.f32 %v305, %v313
    %v316 = vmul.f32 %v314, 1.442695
    %v317 = vpow.pop %v316
    %v318 = vmul.f32 %v315, 1.442695
    %v319 = vpow.pop %v318
    %v320 = vsel %vm149, %v317, 0.0
    %321 = vadd.xlane.f32.xlu0 %v320
    %v322 = vpop.xlane.xlu0 %321
    %v323 = vsel %vm149, %v319, 0.0
    %324 = vadd.xlane.f32.xlu0 %v323
    %v325 = vpop.xlane.xlu0 %324
    %v326 = vrcp.pop %v322
    %v327 = vrcp.pop %v325
    %v328 = vmul.f32 %v317, %v326
    %v329 = vmul.f32 %v319, %v327
    %v330 = vpack.c.bf16 %v328, %v328
    %v331 = vpack.c.bf16 %v329, %v329
    %332 = vrot.lane.b32.xlu0 %v146, 56
    %v333 = vpop.permute.xlu0 %332
    %v335 = vsel %vm149, %v330, 0
    %v338 = vsel %vm222, %v333, 0
    %340 = vmatpush.bf16.msra.mxu0 0
    %341 = vmatpush.bf16.msra.mxu0 0
    %342 = vmatpush.bf16.msra.mxu0 0
    %343 = vmatpush.bf16.msra.mxu0 0
    %344 = vmatpush.bf16.msra.mxu0 0
    %345 = vmatpush.bf16.msra.mxu0 0
    %346 = vmatpush.bf16.msra.mxu0 0
    %347 = vmatpush.bf16.msra.mxu0 %v338
    %348 = vmatmul.bf16.gmra.mxu0 %v335
    %v349 = vpop.f32.mrf.mxu0
    %v350 = vadd.f32 0.0, %v349
    %v351 = vpop.f32.mrf.mxu0
    %352 = vdwg.mxu0
    %353 = vrot.lane.b32.xlu0 %v171, 56
    %v354 = vpop.permute.xlu0 %353
    %v356 = vsel %vm149, %v331, 0
    %v359 = vsel %vm222, %v354, 0
    %361 = vmatpush.bf16.msra.mxu0 0
    %362 = vmatpush.bf16.msra.mxu0 0
    %363 = vmatpush.bf16.msra.mxu0 0
    %364 = vmatpush.bf16.msra.mxu0 0
    %365 = vmatpush.bf16.msra.mxu0 0
    %366 = vmatpush.bf16.msra.mxu0 0
    %367 = vmatpush.bf16.msra.mxu0 0
    %368 = vmatpush.bf16.msra.mxu0 %v359
    %369 = vmatmul.bf16.gmra.mxu0 %v356
    %v370 = vpop.f32.mrf.mxu0
    %v371 = vadd.f32 0.0, %v370
    %v372 = vpop.f32.mrf.mxu0
    %373 = vdwg.mxu0
    %v374 = vld [vmem:[#allocation7 + $0x18] sm:$0xf]
    %v375 = vpack.c.bf16 %v371, %v350
    %v377 = vsel %vm149, %v375, 0
    %v380 = vsel %vm222, %v374, 0
    %382 = vmatpush.bf16.msra.mxu0 0
    %383 = vmatpush.bf16.msra.mxu0 0
    %384 = vmatpush.bf16.msra.mxu0 0
    %385 = vmatpush.bf16.msra.mxu0 0
    %386 = vmatpush.bf16.msra.mxu0 0
    %387 = vmatpush.bf16.msra.mxu0 0
    %388 = vmatpush.bf16.msra.mxu0 0
    %389 = vmatpush.bf16.msra.mxu0 %v380
    %390 = vmatmul.bf16.gmra.mxu0 %v377
    %v391 = vpop.f32.mrf.mxu0
    %v392 = vadd.f32 0.0, %v391
    %v393 = vpop.f32.mrf.mxu0
    %v394 = vadd.f32 0.0, %v393
    %395 = vdwg.mxu0
    %v397 = vsel %vm149, %v261, 0
    %v400 = vsel %vm222, %v260, 0
    %402 = vmatpush.bf16.msra.mxu0 0
    %403 = vmatpush.bf16.msra.mxu0 0
    %404 = vmatpush.bf16.msra.mxu0 0
    %405 = vmatpush.bf16.msra.mxu0 0
    %406 = vmatpush.bf16.msra.mxu0 0
    %407 = vmatpush.bf16.msra.mxu0 0
    %408 = vmatpush.bf16.msra.mxu0 0
    %409 = vmatpush.bf16.msra.mxu0 %v400
    %410 = vmatmul.bf16.gmra.mxu0 %v397
    %v411 = vpop.f32.mrf.mxu0
    %v412 = vadd.f32 %v392, %v411
    %v413 = vpop.f32.mrf.mxu0
    %v414 = vadd.f32 %v394, %v413
    %415 = vdwg.mxu0
    %416 = vrot.lane.b32.xlu0 %v146, 112
    %v417 = vpop.permute.xlu0 %416
    %418 = vrot.lane.b32.xlu0 %v146, 80
    %v419 = vpop.permute.xlu0 %418
    %v421 = vsel %vm149, %v417, 0
    %v424 = vsel %vm149, %v419, 0
    %426 = vmatpush.bf16.xpose.msra.mxu0 0
    %427 = vmatpush.bf16.xpose.msra.mxu0 0
    %428 = vmatpush.bf16.xpose.msra.mxu0 0
    %429 = vmatpush.bf16.xpose.msra.mxu0 0
    %430 = vmatpush.bf16.xpose.msra.mxu0 0
    %431 = vmatpush.bf16.xpose.msra.mxu0 0
    %432 = vmatpush.bf16.xpose.msra.mxu0 0
    %433 = vmatpush.bf16.xpose.msra.mxu0 %v424
    %434 = vmatmul.bf16.gmra.mxu0 %v421
    %v435 = vpop.f32.mrf.mxu0
    %v436 = vadd.f32 %v84, %v435
    %v437 = vpop.f32.mrf.mxu0
    %438 = vdwg.mxu0
    %439 = vrot.lane.b32.xlu0 %v171, 112
    %v440 = vpop.permute.xlu0 %439
    %441 = vrot.lane.b32.xlu0 %v171, 80
    %v442 = vpop.permute.xlu0 %441
    %v444 = vsel %vm149, %v440, 0
    %v447 = vsel %vm149, %v442, 0
    %449 = vmatpush.bf16.xpose.msra.mxu0 0
    %450 = vmatpush.bf16.xpose.msra.mxu0 0
    %451 = vmatpush.bf16.xpose.msra.mxu0 0
    %452 = vmatpush.bf16.xpose.msra.mxu0 0
    %453 = vmatpush.bf16.xpose.msra.mxu0 0
    %454 = vmatpush.bf16.xpose.msra.mxu0 0
    %455 = vmatpush.bf16.xpose.msra.mxu0 0
    %456 = vmatpush.bf16.xpose.msra.mxu0 %v447
    %457 = vmatmul.bf16.gmra.mxu0 %v444
    %v458 = vpop.f32.mrf.mxu0
    %v459 = vadd.f32 %v85, %v458
    %v460 = vpop.f32.mrf.mxu0
    %461 = vdwg.mxu0
    %v462 = vsel %vm149, %v436, -inf
    %463 = vmax.xlane.f32.xlu0 %v462
    %v464 = vpop.xlane.xlu0 %463
    %v465 = vsel %vm149, %v459, -inf
    %466 = vmax.xlane.f32.xlu0 %v465
    %v467 = vpop.xlane.xlu0 %466
    %v468 = vsub.f32 %v436, %v464
    %v469 = vsub.f32 %v459, %v467
    %v470 = vmul.f32 %v468, 1.442695
    %v471 = vpow.pop %v470
    %v472 = vmul.f32 %v469, 1.442695
    %v473 = vpow.pop %v472
    %v474 = vsel %vm149, %v471, 0.0
    %475 = vadd.xlane.f32.xlu0 %v474
    %v476 = vpop.xlane.xlu0 %475
    %v477 = vsel %vm149, %v473, 0.0
    %478 = vadd.xlane.f32.xlu0 %v477
    %v479 = vpop.xlane.xlu0 %478
    %v480 = vrcp.pop %v476
    %v481 = vrcp.pop %v479
    %v482 = vmul.f32 %v471, %v480
    %v483 = vmul.f32 %v473, %v481
    %v484 = vpack.c.bf16 %v482, %v482
    %v485 = vpack.c.bf16 %v483, %v483
    %486 = vrot.lane.b32.xlu0 %v146, 48
    %v487 = vpop.permute.xlu0 %486
    %v489 = vsel %vm149, %v484, 0
    %v492 = vsel %vm222, %v487, 0
    %494 = vmatpush.bf16.msra.mxu0 0
    %495 = vmatpush.bf16.msra.mxu0 0
    %496 = vmatpush.bf16.msra.mxu0 0
    %497 = vmatpush.bf16.msra.mxu0 0
    %498 = vmatpush.bf16.msra.mxu0 0
    %499 = vmatpush.bf16.msra.mxu0 0
    %500 = vmatpush.bf16.msra.mxu0 0
    %501 = vmatpush.bf16.msra.mxu0 %v492
    %502 = vmatmul.bf16.gmra.mxu0 %v489
    %v503 = vpop.f32.mrf.mxu0
    %v504 = vadd.f32 0.0, %v503
    %v505 = vpop.f32.mrf.mxu0
    %506 = vdwg.mxu0
    %507 = vrot.lane.b32.xlu0 %v171, 48
    %v508 = vpop.permute.xlu0 %507
    %v510 = vsel %vm149, %v485, 0
    %v513 = vsel %vm222, %v508, 0
    %515 = vmatpush.bf16.msra.mxu0 0
    %516 = vmatpush.bf16.msra.mxu0 0
    %517 = vmatpush.bf16.msra.mxu0 0
    %518 = vmatpush.bf16.msra.mxu0 0
    %519 = vmatpush.bf16.msra.mxu0 0
    %520 = vmatpush.bf16.msra.mxu0 0
    %521 = vmatpush.bf16.msra.mxu0 0
    %522 = vmatpush.bf16.msra.mxu0 %v513
    %523 = vmatmul.bf16.gmra.mxu0 %v510
    %v524 = vpop.f32.mrf.mxu0
    %v525 = vadd.f32 0.0, %v524
    %v526 = vpop.f32.mrf.mxu0
    %527 = vdwg.mxu0
    %v528 = vld [vmem:[#allocation7 + $0x20] sm:$0xf]
    %v529 = vpack.c.bf16 %v525, %v504
    %v531 = vsel %vm149, %v529, 0
    %v534 = vsel %vm222, %v528, 0
    %536 = vmatpush.bf16.msra.mxu0 0
    %537 = vmatpush.bf16.msra.mxu0 0
    %538 = vmatpush.bf16.msra.mxu0 0
    %539 = vmatpush.bf16.msra.mxu0 0
    %540 = vmatpush.bf16.msra.mxu0 0
    %541 = vmatpush.bf16.msra.mxu0 0
    %542 = vmatpush.bf16.msra.mxu0 0
    %543 = vmatpush.bf16.msra.mxu0 %v534
    %544 = vmatmul.bf16.gmra.mxu0 %v531
    %v545 = vpop.f32.mrf.mxu0
    %v546 = vadd.f32 0.0, %v545
    %v547 = vpop.f32.mrf.mxu0
    %v548 = vadd.f32 0.0, %v547
    %549 = vdwg.mxu0
    %v550 = vadd.f32 %v412, %v546
    %v551 = vadd.f32 %v414, %v548
    %552 = vrot.lane.b32.xlu0 %v146, 104
    %v553 = vpop.permute.xlu0 %552
    %554 = vrot.lane.b32.xlu0 %v146, 72
    %v555 = vpop.permute.xlu0 %554
    %v557 = vsel %vm149, %v553, 0
    %v560 = vsel %vm149, %v555, 0
    %562 = vmatpush.bf16.xpose.msra.mxu0 0
    %563 = vmatpush.bf16.xpose.msra.mxu0 0
    %564 = vmatpush.bf16.xpose.msra.mxu0 0
    %565 = vmatpush.bf16.xpose.msra.mxu0 0
    %566 = vmatpush.bf16.xpose.msra.mxu0 0
    %567 = vmatpush.bf16.xpose.msra.mxu0 0
    %568 = vmatpush.bf16.xpose.msra.mxu0 0
    %569 = vmatpush.bf16.xpose.msra.mxu0 %v560
    %570 = vmatmul.bf16.gmra.mxu0 %v557
    %v571 = vpop.f32.mrf.mxu0
    %v572 = vadd.f32 %v84, %v571
    %v573 = vpop.f32.mrf.mxu0
    %574 = vdwg.mxu0
    %575 = vrot.lane.b32.xlu0 %v171, 104
    %v576 = vpop.permute.xlu0 %575
    %577 = vrot.lane.b32.xlu0 %v171, 72
    %v578 = vpop.permute.xlu0 %577
    %v580 = vsel %vm149, %v576, 0
    %v583 = vsel %vm149, %v578, 0
    %585 = vmatpush.bf16.xpose.msra.mxu0 0
    %586 = vmatpush.bf16.xpose.msra.mxu0 0
    %587 = vmatpush.bf16.xpose.msra.mxu0 0
    %588 = vmatpush.bf16.xpose.msra.mxu0 0
    %589 = vmatpush.bf16.xpose.msra.mxu0 0
    %590 = vmatpush.bf16.xpose.msra.mxu0 0
    %591 = vmatpush.bf16.xpose.msra.mxu0 0
    %592 = vmatpush.bf16.xpose.msra.mxu0 %v583
    %593 = vmatmul.bf16.gmra.mxu0 %v580
    %v594 = vpop.f32.mrf.mxu0
    %v595 = vadd.f32 %v85, %v594
    %v596 = vpop.f32.mrf.mxu0
    %597 = vdwg.mxu0
    %v598 = vsel %vm149, %v572, -inf
    %599 = vmax.xlane.f32.xlu0 %v598
    %v600 = vpop.xlane.xlu0 %599
    %v601 = vsel %vm149, %v595, -inf
    %602 = vmax.xlane.f32.xlu0 %v601
    %v603 = vpop.xlane.xlu0 %602
    %v604 = vsub.f32 %v572, %v600
    %v605 = vsub.f32 %v595, %v603
    %v606 = vmul.f32 %v604, 1.442695
    %v607 = vpow.pop %v606
    %v608 = vmul.f32 %v605, 1.442695
    %v609 = vpow.pop %v608
    %v610 = vsel %vm149, %v607, 0.0
    %611 = vadd.xlane.f32.xlu0 %v610
    %v612 = vpop.xlane.xlu0 %611
    %v613 = vsel %vm149, %v609, 0.0
    %614 = vadd.xlane.f32.xlu0 %v613
    %v615 = vpop.xlane.xlu0 %614
    %v616 = vrcp.pop %v612
    %v617 = vrcp.pop %v615
    %v618 = vmul.f32 %v607, %v616
    %v619 = vmul.f32 %v609, %v617
    %v620 = vpack.c.bf16 %v618, %v618
    %v621 = vpack.c.bf16 %v619, %v619
    %622 = vrot.lane.b32.xlu0 %v146, 40
    %v623 = vpop.permute.xlu0 %622
    %v625 = vsel %vm149, %v620, 0
    %v628 = vsel %vm222, %v623, 0
    %630 = vmatpush.bf16.msra.mxu0 0
    %631 = vmatpush.bf16.msra.mxu0 0
    %632 = vmatpush.bf16.msra.mxu0 0
    %633 = vmatpush.bf16.msra.mxu0 0
    %634 = vmatpush.bf16.msra.mxu0 0
    %635 = vmatpush.bf16.msra.mxu0 0
    %636 = vmatpush.bf16.msra.mxu0 0
    %637 = vmatpush.bf16.msra.mxu0 %v628
    %638 = vmatmul.bf16.gmra.mxu0 %v625
    %v639 = vpop.f32.mrf.mxu0
    %v640 = vadd.f32 0.0, %v639
    %v641 = vpop.f32.mrf.mxu0
    %642 = vdwg.mxu0
    %643 = vrot.lane.b32.xlu0 %v171, 40
    %v644 = vpop.permute.xlu0 %643
    %v646 = vsel %vm149, %v621, 0
    %v649 = vsel %vm222, %v644, 0
    %651 = vmatpush.bf16.msra.mxu0 0
    %652 = vmatpush.bf16.msra.mxu0 0
    %653 = vmatpush.bf16.msra.mxu0 0
    %654 = vmatpush.bf16.msra.mxu0 0
    %655 = vmatpush.bf16.msra.mxu0 0
    %656 = vmatpush.bf16.msra.mxu0 0
    %657 = vmatpush.bf16.msra.mxu0 0
    %658 = vmatpush.bf16.msra.mxu0 %v649
    %659 = vmatmul.bf16.gmra.mxu0 %v646
    %v660 = vpop.f32.mrf.mxu0
    %v661 = vadd.f32 0.0, %v660
    %v662 = vpop.f32.mrf.mxu0
    %663 = vdwg.mxu0
    %v664 = vld [vmem:[#allocation7 + $0x28] sm:$0xf]
    %v665 = vpack.c.bf16 %v661, %v640
    %v667 = vsel %vm149, %v665, 0
    %v670 = vsel %vm222, %v664, 0
    %672 = vmatpush.bf16.msra.mxu0 0
    %673 = vmatpush.bf16.msra.mxu0 0
    %674 = vmatpush.bf16.msra.mxu0 0
    %675 = vmatpush.bf16.msra.mxu0 0
    %676 = vmatpush.bf16.msra.mxu0 0
    %677 = vmatpush.bf16.msra.mxu0 0
    %678 = vmatpush.bf16.msra.mxu0 0
    %679 = vmatpush.bf16.msra.mxu0 %v670
    %680 = vmatmul.bf16.gmra.mxu0 %v667
    %v681 = vpop.f32.mrf.mxu0
    %v682 = vadd.f32 0.0, %v681
    %v683 = vpop.f32.mrf.mxu0
    %v684 = vadd.f32 0.0, %v683
    %685 = vdwg.mxu0
    %v686 = vadd.f32 %v550, %v682
    %v687 = vadd.f32 %v551, %v684
    %v688 = vadd.f32 %v82, %v686
    %v689 = vadd.f32 %v83, %v687
    %v690 = vperm.slane %v103, 0
    %v691 = vadd.f32 %v688, %v690
    %v692 = vadd.f32 %v689, %v690
    %v693 = vsel %vm124, %v691, 0.0
    %694 = vadd.xlane.f32.xlu0 %v693
    %v695 = vpop.xlane.xlu0 %694
    %v696 = vsel %vm124, %v692, 0.0
    %697 = vadd.xlane.f32.xlu0 %v696
    %v698 = vpop.xlane.xlu0 %697
    %v699 = vrcp.pop 32.0
    %v700 = vmul.f32 32.0, %v699
    %v701 = vsub.f32 1.0, %v700
    %v702 = vmul.f32 %v699, %v701
    %v703 = vadd.f32 %v699, %v702
    %vm704 = vweird.f32 %v699
    %v705 = vsel %vm704, %v699, %v703
    %v706 = vmul.f32 %v695, %v705
    %v707 = vmul.f32 %v698, %v705
    %v708 = vsub.f32 %v691, %v706
    %v709 = vsub.f32 %v692, %v707
    %v710 = vmul.f32 %v708, %v708
    %v711 = vmul.f32 %v709, %v709
    %v712 = vsel %vm124, %v710, 0.0
    %713 = vadd.xlane.f32.xlu0 %v712
    %v714 = vpop.xlane.xlu0 %713
    %v715 = vsel %vm124, %v711, 0.0
    %716 = vadd.xlane.f32.xlu0 %v715
    %v717 = vpop.xlane.xlu0 %716
    %v718 = vmul.f32 %v714, %v705
    %v719 = vmul.f32 %v717, %v705
    %v720 = vadd.f32 %v718, 1e-05
    %v721 = vadd.f32 %v719, 1e-05
    %v722 = vrsqrt.pop %v720
    %v723 = vmul.f32 %v722, %v720
    %v724 = vmul.f32 %v723, %v722
    %v725 = vmul.f32 0.5, %v724
    %v726 = vsub.f32 1.5, %v725
    %v727 = vmul.f32 %v722, %v726
    %vm728 = vweird.f32 %v720
    %vm729 = vweird.f32 %v722
    %vm730 = vmor %vm728, %vm729
    %v731 = vsel %vm730, %v722, %v727
    %v732 = vrsqrt.pop %v721
    %v733 = vmul.f32 %v732, %v721
    %v734 = vmul.f32 %v733, %v732
    %v735 = vmul.f32 0.5, %v734
    %v736 = vsub.f32 1.5, %v735
    %v737 = vmul.f32 %v732, %v736
    %vm738 = vweird.f32 %v721
    %vm739 = vweird.f32 %v732
    %vm740 = vmor %vm738, %vm739
    %v741 = vsel %vm740, %v732, %v737
    %v742 = vmul.f32 %v708, %v731
    %v743 = vmul.f32 %v709, %v741
    %v744 = vperm.slane %v106, 0
    %v745 = vmul.f32 %v742, %v744
    %v746 = vmul.f32 %v743, %v744
    %v747 = vperm.slane %v107, 0
    %v748 = vadd.f32 %v745, %v747
    %v749 = vadd.f32 %v746, %v747
    %v750 = vpack.c.bf16 %v749, %v748
    %v751 = vperm.slane %v104, 0
    %v756 = vunpack.c.l.b16 %v90
    %v757 = vunpack.c.l.b16 %v91
    %v758 = vunpack.c.l.b16 %v92
    %v759 = vunpack.c.l.b16 %v93
    %v760 = vpack.c.b16 %v757, %v756
    %v761 = vpack.c.b16 %v759, %v758
    %v765 = vsel %vm124, %v750, 0
    %767 = vmatpush.bf16.msra.mxu0 0
    %768 = vmatpush.bf16.msra.mxu0 0
    %769 = vmatpush.bf16.msra.mxu0 0
    %770 = vmatpush.bf16.msra.mxu0 0
    %771 = vmatpush.bf16.msra.mxu0 0
    %772 = vmatpush.bf16.msra.mxu0 0
    %773 = vmatpush.bf16.msra.mxu0 %v761
    %774 = vmatpush.bf16.msra.mxu0 %v760
    %775 = vmatmul.bf16.gmra.mxu0 %v765
    %v776 = vpop.f32.mrf.mxu0
    %v777 = vadd.f32 %v751, %v776
    %v778 = vpop.f32.mrf.mxu0
    %v779 = vadd.f32 %v751, %v778
    %780 = vdwg.mxu0
    %v781 = vmax.f32 %v777, 0.0
    %v782 = vmax.f32 %v779, 0.0
    %v783 = vpack.c.bf16 %v782, %v781
    %v784 = vperm.slane %v105, 0
    %v793 = vunpack.c.l.b16 %v94
    %v794 = vunpack.c.l.b16 %v95
    %v795 = vunpack.c.l.b16 %v96
    %v796 = vunpack.c.l.b16 %v97
    %v797 = vunpack.c.l.b16 %v98
    %v798 = vunpack.c.l.b16 %v99
    %v799 = vunpack.c.l.b16 %v100
    %v800 = vunpack.c.l.b16 %v101
    %v801 = vpack.c.b16 %v794, %v793
    %v802 = vpack.c.b16 %v796, %v795
    %v803 = vpack.c.b16 %v798, %v797
    %v804 = vpack.c.b16 %v800, %v799
    %vm809 = vcmask 523264
    %v811 = vsel %vm809, %v783, 0
    %813 = vmatpush.bf16.msra.mxu0 0
    %814 = vmatpush.bf16.msra.mxu0 0
    %815 = vmatpush.bf16.msra.mxu0 0
    %816 = vmatpush.bf16.msra.mxu0 0
    %817 = vmatpush.bf16.msra.mxu0 %v804
    %818 = vmatpush.bf16.msra.mxu0 %v803
    %819 = vmatpush.bf16.msra.mxu0 %v802
    %820 = vmatpush.bf16.msra.mxu0 %v801
    %821 = vmatmul.bf16.gmra.mxu0 %v811
    %v822 = vpop.f32.mrf.mxu0
    %v823 = vadd.f32 %v784, %v822
    %v824 = vpop.f32.mrf.mxu0
    %v825 = vadd.f32 %v784, %v824
    %826 = vdwg.mxu0
    %v827 = vadd.f32 %v748, %v823
    %v828 = vadd.f32 %v749, %v825
    %v829 = vsel %vm124, %v827, 0.0
    %830 = vadd.xlane.f32.xlu0 %v829
    %v831 = vpop.xlane.xlu0 %830
    %v832 = vsel %vm124, %v828, 0.0
    %833 = vadd.xlane.f32.xlu0 %v832
    %v834 = vpop.xlane.xlu0 %833
    %v835 = vmul.f32 %v831, %v705
    %v836 = vmul.f32 %v834, %v705
    %v837 = vsub.f32 %v827, %v835
    %v838 = vsub.f32 %v828, %v836
    %v839 = vmul.f32 %v837, %v837
    %v840 = vmul.f32 %v838, %v838
    %v841 = vsel %vm124, %v839, 0.0
    %842 = vadd.xlane.f32.xlu0 %v841
    %v843 = vpop.xlane.xlu0 %842
    %v844 = vsel %vm124, %v840, 0.0
    %845 = vadd.xlane.f32.xlu0 %v844
    %v846 = vpop.xlane.xlu0 %845
    %v847 = vmul.f32 %v843, %v705
    %v848 = vmul.f32 %v846, %v705
    %v849 = vadd.f32 %v847, 1e-05
    %v850 = vadd.f32 %v848, 1e-05
    %v851 = vrsqrt.pop %v849
    %v852 = vmul.f32 %v851, %v849
    %v853 = vmul.f32 %v852, %v851
    %v854 = vmul.f32 0.5, %v853
    %v855 = vsub.f32 1.5, %v854
    %v856 = vmul.f32 %v851, %v855
    %vm857 = vweird.f32 %v849
    %vm858 = vweird.f32 %v851
    %vm859 = vmor %vm857, %vm858
    %v860 = vsel %vm859, %v851, %v856
    %v861 = vrsqrt.pop %v850
    %v862 = vmul.f32 %v861, %v850
    %v863 = vmul.f32 %v862, %v861
    %v864 = vmul.f32 0.5, %v863
    %v865 = vsub.f32 1.5, %v864
    %v866 = vmul.f32 %v861, %v865
    %vm867 = vweird.f32 %v850
    %vm868 = vweird.f32 %v861
    %vm869 = vmor %vm867, %vm868
    %v870 = vsel %vm869, %v861, %v866
    %v871 = vmul.f32 %v837, %v860
    %v872 = vmul.f32 %v838, %v870
    %v873 = vperm.slane %v108, 0
    %v874 = vmul.f32 %v871, %v873
    %v875 = vmul.f32 %v872, %v873
    %v876 = vperm.slane %v109, 0
    %v877 = vadd.f32 %v874, %v876
    %v878 = vadd.f32 %v875, %v876
    %s879 = scalar_lea.vmem [#allocation7], 96
    %v880 = vld [vmem:[%s879] sm:$0xf]
    %v881 = vld [vmem:[%s879 + $0x4] sm:$0xf]
    %v882 = vld [vmem:[%s879 + $0x8] sm:$0xf]
    %v883 = vld [vmem:[%s879 + $0xc] sm:$0xf]
    %v884 = vld [vmem:[%s879 + $0x30] sm:$0xf]
    %v885 = vld [vmem:[%s879 + $0x34] sm:$0xf]
    %v886 = vld [vmem:[%s879 + $0x38] sm:$0xf]
    %v887 = vld [vmem:[%s879 + $0x3c] sm:$0xf]
    %v888 = vld [vmem:[%s879 + $0x40] sm:$0xf]
    %v889 = vld [vmem:[%s879 + $0x44] sm:$0xf]
    %v890 = vld [vmem:[%s879 + $0x48] sm:$0xf]
    %v891 = vld [vmem:[%s879 + $0x4c] sm:$0xf]
    %v892 = vld [vmem:[%s879 + $0x50] sm:$0xf]
    %v893 = vld [vmem:[%s879 + $0x54] sm:$0xf]
    %v894 = vld [vmem:[%s879 + $0x58] sm:$0xf]
    %v895 = vld [vmem:[%s879 + $0x5c] sm:$0xf]
    %s896 = scalar_lea.vmem [#allocation8], 8
    %v897 = vld [vmem:[%s896] sm:$0x1]
    %v898 = vld [vmem:[%s896 + $0x1] sm:$0x1]
    %v899 = vld [vmem:[%s896 + $0x2] sm:$0x1]
    %v900 = vld [vmem:[%s896 + $0x3] sm:$0x1]
    %v901 = vld [vmem:[%s896 + $0x4] sm:$0x1]
    %v902 = vld [vmem:[%s896 + $0x5] sm:$0x1]
    %v903 = vld [vmem:[%s896 + $0x6] sm:$0x1]
    %v904 = vld [vmem:[%s896 + $0x7] sm:$0x1]
    %v905 = vpack.c.bf16 %v878, %v877
    %v906 = vperm.slane %v897, 0
    %v911 = vunpack.c.l.b16 %v880
    %v912 = vunpack.c.l.b16 %v881
    %v913 = vunpack.c.l.b16 %v882
    %v914 = vunpack.c.l.b16 %v883
    %v915 = vpack.c.b16 %v912, %v911
    %v916 = vpack.c.b16 %v914, %v913
    %v920 = vsel %vm124, %v905, 0
    %922 = vmatpush.bf16.msra.mxu0 0
    %923 = vmatpush.bf16.msra.mxu0 0
    %924 = vmatpush.bf16.msra.mxu0 0
    %925 = vmatpush.bf16.msra.mxu0 0
    %926 = vmatpush.bf16.msra.mxu0 0
    %927 = vmatpush.bf16.msra.mxu0 0
    %928 = vmatpush.bf16.msra.mxu0 %v916
    %929 = vmatpush.bf16.msra.mxu0 %v915
    %930 = vmatmul.bf16.gmra.mxu0 %v920
    %v931 = vpop.f32.mrf.mxu0
    %v932 = vadd.f32 %v906, %v931
    %v933 = vpop.f32.mrf.mxu0
    %v934 = vadd.f32 %v906, %v933
    %935 = vdwg.mxu0
    %v936 = vpack.c.bf16 %v932, %v932
    %v937 = vpack.c.bf16 %v934, %v934
    %v939 = vunpack.c.l.b16 %v936
    %v940 = vpack.c.b16 %v939, %v939
    %941 = vrot.lane.b32.xlu0 %v940, 96
    %v942 = vpop.permute.xlu0 %941
    %v944 = vsel %vm149, %v936, 0
    %v947 = vsel %vm149, %v942, 0
    %949 = vmatpush.bf16.xpose.msra.mxu0 0
    %950 = vmatpush.bf16.xpose.msra.mxu0 0
    %951 = vmatpush.bf16.xpose.msra.mxu0 0
    %952 = vmatpush.bf16.xpose.msra.mxu0 0
    %953 = vmatpush.bf16.xpose.msra.mxu0 0
    %954 = vmatpush.bf16.xpose.msra.mxu0 0
    %955 = vmatpush.bf16.xpose.msra.mxu0 0
    %956 = vmatpush.bf16.xpose.msra.mxu0 %v947
    %957 = vmatmul.bf16.gmra.mxu0 %v944
    %v958 = vpop.f32.mrf.mxu0
    %v959 = vadd.f32 %v84, %v958
    %v960 = vpop.f32.mrf.mxu0
    %961 = vdwg.mxu0
    %v963 = vunpack.c.l.b16 %v937
    %v964 = vpack.c.b16 %v963, %v963
    %965 = vrot.lane.b32.xlu0 %v964, 96
    %v966 = vpop.permute.xlu0 %965
    %v968 = vsel %vm149, %v937, 0
    %v971 = vsel %vm149, %v966, 0
    %973 = vmatpush.bf16.xpose.msra.mxu0 0
    %974 = vmatpush.bf16.xpose.msra.mxu0 0
    %975 = vmatpush.bf16.xpose.msra.mxu0 0
    %976 = vmatpush.bf16.xpose.msra.mxu0 0
    %977 = vmatpush.bf16.xpose.msra.mxu0 0
    %978 = vmatpush.bf16.xpose.msra.mxu0 0
    %979 = vmatpush.bf16.xpose.msra.mxu0 0
    %980 = vmatpush.bf16.xpose.msra.mxu0 %v971
    %981 = vmatmul.bf16.gmra.mxu0 %v968
    %v982 = vpop.f32.mrf.mxu0
    %v983 = vadd.f32 %v85, %v982
    %v984 = vpop.f32.mrf.mxu0
    %985 = vdwg.mxu0
    %v986 = vsel %vm149, %v959, -inf
    %987 = vmax.xlane.f32.xlu0 %v986
    %v988 = vpop.xlane.xlu0 %987
    %v989 = vsel %vm149, %v983, -inf
    %990 = vmax.xlane.f32.xlu0 %v989
    %v991 = vpop.xlane.xlu0 %990
    %v992 = vsub.f32 %v959, %v988
    %v993 = vsub.f32 %v983, %v991
    %v994 = vmul.f32 %v992, 1.442695
    %v995 = vpow.pop %v994
    %v996 = vmul.f32 %v993, 1.442695
    %v997 = vpow.pop %v996
    %v998 = vsel %vm149, %v995, 0.0
    %999 = vadd.xlane.f32.xlu0 %v998
    %v1000 = vpop.xlane.xlu0 %999
    %v1001 = vsel %vm149, %v997, 0.0
    %1002 = vadd.xlane.f32.xlu0 %v1001
    %v1003 = vpop.xlane.xlu0 %1002
    %v1004 = vrcp.pop %v1000
    %v1005 = vrcp.pop %v1003
    %v1006 = vmul.f32 %v995, %v1004
    %v1007 = vmul.f32 %v997, %v1005
    %v1008 = vpack.c.bf16 %v1006, %v1006
    %v1009 = vpack.c.bf16 %v1007, %v1007
    %1010 = vrot.lane.b32.xlu0 %v940, 64
    %v1011 = vpop.permute.xlu0 %1010
    %v1013 = vsel %vm149, %v1008, 0
    %v1016 = vsel %vm222, %v1011, 0
    %1018 = vmatpush.bf16.msra.mxu0 0
    %1019 = vmatpush.bf16.msra.mxu0 0
    %1020 = vmatpush.bf16.msra.mxu0 0
    %1021 = vmatpush.bf16.msra.mxu0 0
    %1022 = vmatpush.bf16.msra.mxu0 0
    %1023 = vmatpush.bf16.msra.mxu0 0
    %1024 = vmatpush.bf16.msra.mxu0 0
    %1025 = vmatpush.bf16.msra.mxu0 %v1016
    %1026 = vmatmul.bf16.gmra.mxu0 %v1013
    %v1027 = vpop.f32.mrf.mxu0
    %v1028 = vadd.f32 0.0, %v1027
    %v1029 = vpop.f32.mrf.mxu0
    %1030 = vdwg.mxu0
    %1031 = vrot.lane.b32.xlu0 %v964, 64
    %v1032 = vpop.permute.xlu0 %1031
    %v1034 = vsel %vm149, %v1009, 0
    %v1037 = vsel %vm222, %v1032, 0
    %1039 = vmatpush.bf16.msra.mxu0 0
    %1040 = vmatpush.bf16.msra.mxu0 0
    %1041 = vmatpush.bf16.msra.mxu0 0
    %1042 = vmatpush.bf16.msra.mxu0 0
    %1043 = vmatpush.bf16.msra.mxu0 0
    %1044 = vmatpush.bf16.msra.mxu0 0
    %1045 = vmatpush.bf16.msra.mxu0 0
    %1046 = vmatpush.bf16.msra.mxu0 %v1037
    %1047 = vmatmul.bf16.gmra.mxu0 %v1034
    %v1048 = vpop.f32.mrf.mxu0
    %v1049 = vadd.f32 0.0, %v1048
    %v1050 = vpop.f32.mrf.mxu0
    %1051 = vdwg.mxu0
    %v1052 = vld [vmem:[%s879 + $0x10] sm:$0xf]
    %v1053 = vpack.c.bf16 %v1049, %v1028
    %1054 = vrot.lane.b32.xlu0 %v940, 120
    %v1055 = vpop.permute.xlu0 %1054
    %1056 = vrot.lane.b32.xlu0 %v940, 88
    %v1057 = vpop.permute.xlu0 %1056
    %v1059 = vsel %vm149, %v1055, 0
    %v1062 = vsel %vm149, %v1057, 0
    %1064 = vmatpush.bf16.xpose.msra.mxu0 0
    %1065 = vmatpush.bf16.xpose.msra.mxu0 0
    %1066 = vmatpush.bf16.xpose.msra.mxu0 0
    %1067 = vmatpush.bf16.xpose.msra.mxu0 0
    %1068 = vmatpush.bf16.xpose.msra.mxu0 0
    %1069 = vmatpush.bf16.xpose.msra.mxu0 0
    %1070 = vmatpush.bf16.xpose.msra.mxu0 0
    %1071 = vmatpush.bf16.xpose.msra.mxu0 %v1062
    %1072 = vmatmul.bf16.gmra.mxu0 %v1059
    %v1073 = vpop.f32.mrf.mxu0
    %v1074 = vadd.f32 %v84, %v1073
    %v1075 = vpop.f32.mrf.mxu0
    %1076 = vdwg.mxu0
    %1077 = vrot.lane.b32.xlu0 %v964, 120
    %v1078 = vpop.permute.xlu0 %1077
    %1079 = vrot.lane.b32.xlu0 %v964, 88
    %v1080 = vpop.permute.xlu0 %1079
    %v1082 = vsel %vm149, %v1078, 0
    %v1085 = vsel %vm149, %v1080, 0
    %1087 = vmatpush.bf16.xpose.msra.mxu0 0
    %1088 = vmatpush.bf16.xpose.msra.mxu0 0
    %1089 = vmatpush.bf16.xpose.msra.mxu0 0
    %1090 = vmatpush.bf16.xpose.msra.mxu0 0
    %1091 = vmatpush.bf16.xpose.msra.mxu0 0
    %1092 = vmatpush.bf16.xpose.msra.mxu0 0
    %1093 = vmatpush.bf16.xpose.msra.mxu0 0
    %1094 = vmatpush.bf16.xpose.msra.mxu0 %v1085
    %1095 = vmatmul.bf16.gmra.mxu0 %v1082
    %v1096 = vpop.f32.mrf.mxu0
    %v1097 = vadd.f32 %v85, %v1096
    %v1098 = vpop.f32.mrf.mxu0
    %1099 = vdwg.mxu0
    %v1100 = vsel %vm149, %v1074, -inf
    %1101 = vmax.xlane.f32.xlu0 %v1100
    %v1102 = vpop.xlane.xlu0 %1101
    %v1103 = vsel %vm149, %v1097, -inf
    %1104 = vmax.xlane.f32.xlu0 %v1103
    %v1105 = vpop.xlane.xlu0 %1104
    %v1106 = vsub.f32 %v1074, %v1102
    %v1107 = vsub.f32 %v1097, %v1105
    %v1108 = vmul.f32 %v1106, 1.442695
    %v1109 = vpow.pop %v1108
    %v1110 = vmul.f32 %v1107, 1.442695
    %v1111 = vpow.pop %v1110
    %v1112 = vsel %vm149, %v1109, 0.0
    %1113 = vadd.xlane.f32.xlu0 %v1112
    %v1114 = vpop.xlane.xlu0 %1113
    %v1115 = vsel %vm149, %v1111, 0.0
    %1116 = vadd.xlane.f32.xlu0 %v1115
    %v1117 = vpop.xlane.xlu0 %1116
    %v1118 = vrcp.pop %v1114
    %v1119 = vrcp.pop %v1117
    %v1120 = vmul.f32 %v1109, %v1118
    %v1121 = vmul.f32 %v1111, %v1119
    %v1122 = vpack.c.bf16 %v1120, %v1120
    %v1123 = vpack.c.bf16 %v1121, %v1121
    %1124 = vrot.lane.b32.xlu0 %v940, 56
    %v1125 = vpop.permute.xlu0 %1124
    %v1127 = vsel %vm149, %v1122, 0
    %v1130 = vsel %vm222, %v1125, 0
    %1132 = vmatpush.bf16.msra.mxu0 0
    %1133 = vmatpush.bf16.msra.mxu0 0
    %1134 = vmatpush.bf16.msra.mxu0 0
    %1135 = vmatpush.bf16.msra.mxu0 0
    %1136 = vmatpush.bf16.msra.mxu0 0
    %1137 = vmatpush.bf16.msra.mxu0 0
    %1138 = vmatpush.bf16.msra.mxu0 0
    %1139 = vmatpush.bf16.msra.mxu0 %v1130
    %1140 = vmatmul.bf16.gmra.mxu0 %v1127
    %v1141 = vpop.f32.mrf.mxu0
    %v1142 = vadd.f32 0.0, %v1141
    %v1143 = vpop.f32.mrf.mxu0
    %1144 = vdwg.mxu0
    %1145 = vrot.lane.b32.xlu0 %v964, 56
    %v1146 = vpop.permute.xlu0 %1145
    %v1148 = vsel %vm149, %v1123, 0
    %v1151 = vsel %vm222, %v1146, 0
    %1153 = vmatpush.bf16.msra.mxu0 0
    %1154 = vmatpush.bf16.msra.mxu0 0
    %1155 = vmatpush.bf16.msra.mxu0 0
    %1156 = vmatpush.bf16.msra.mxu0 0
    %1157 = vmatpush.bf16.msra.mxu0 0
    %1158 = vmatpush.bf16.msra.mxu0 0
    %1159 = vmatpush.bf16.msra.mxu0 0
    %1160 = vmatpush.bf16.msra.mxu0 %v1151
    %1161 = vmatmul.bf16.gmra.mxu0 %v1148
    %v1162 = vpop.f32.mrf.mxu0
    %v1163 = vadd.f32 0.0, %v1162
    %v1164 = vpop.f32.mrf.mxu0
    %1165 = vdwg.mxu0
    %v1166 = vld [vmem:[%s879 + $0x18] sm:$0xf]
    %v1167 = vpack.c.bf16 %v1163, %v1142
    %v1169 = vsel %vm149, %v1167, 0
    %v1172 = vsel %vm222, %v1166, 0
    %1174 = vmatpush.bf16.msra.mxu0 0
    %1175 = vmatpush.bf16.msra.mxu0 0
    %1176 = vmatpush.bf16.msra.mxu0 0
    %1177 = vmatpush.bf16.msra.mxu0 0
    %1178 = vmatpush.bf16.msra.mxu0 0
    %1179 = vmatpush.bf16.msra.mxu0 0
    %1180 = vmatpush.bf16.msra.mxu0 0
    %1181 = vmatpush.bf16.msra.mxu0 %v1172
    %1182 = vmatmul.bf16.gmra.mxu0 %v1169
    %v1183 = vpop.f32.mrf.mxu0
    %v1184 = vadd.f32 0.0, %v1183
    %v1185 = vpop.f32.mrf.mxu0
    %v1186 = vadd.f32 0.0, %v1185
    %1187 = vdwg.mxu0
    %v1189 = vsel %vm149, %v1053, 0
    %v1192 = vsel %vm222, %v1052, 0
    %1194 = vmatpush.bf16.msra.mxu0 0
    %1195 = vmatpush.bf16.msra.mxu0 0
    %1196 = vmatpush.bf16.msra.mxu0 0
    %1197 = vmatpush.bf16.msra.mxu0 0
    %1198 = vmatpush.bf16.msra.mxu0 0
    %1199 = vmatpush.bf16.msra.mxu0 0
    %1200 = vmatpush.bf16.msra.mxu0 0
    %1201 = vmatpush.bf16.msra.mxu0 %v1192
    %1202 = vmatmul.bf16.gmra.mxu0 %v1189
    %v1203 = vpop.f32.mrf.mxu0
    %v1204 = vadd.f32 %v1184, %v1203
    %v1205 = vpop.f32.mrf.mxu0
    %v1206 = vadd.f32 %v1186, %v1205
    %1207 = vdwg.mxu0
    %1208 = vrot.lane.b32.xlu0 %v940, 112
    %v1209 = vpop.permute.xlu0 %1208
    %1210 = vrot.lane.b32.xlu0 %v940, 80
    %v1211 = vpop.permute.xlu0 %1210
    %v1213 = vsel %vm149, %v1209, 0
    %v1216 = vsel %vm149, %v1211, 0
    %1218 = vmatpush.bf16.xpose.msra.mxu0 0
    %1219 = vmatpush.bf16.xpose.msra.mxu0 0
    %1220 = vmatpush.bf16.xpose.msra.mxu0 0
    %1221 = vmatpush.bf16.xpose.msra.mxu0 0
    %1222 = vmatpush.bf16.xpose.msra.mxu0 0
    %1223 = vmatpush.bf16.xpose.msra.mxu0 0
    %1224 = vmatpush.bf16.xpose.msra.mxu0 0
    %1225 = vmatpush.bf16.xpose.msra.mxu0 %v1216
    %1226 = vmatmul.bf16.gmra.mxu0 %v1213
    %v1227 = vpop.f32.mrf.mxu0
    %v1228 = vadd.f32 %v84, %v1227
    %v1229 = vpop.f32.mrf.mxu0
    %1230 = vdwg.mxu0
    %1231 = vrot.lane.b32.xlu0 %v964, 112
    %v1232 = vpop.permute.xlu0 %1231
    %1233 = vrot.lane.b32.xlu0 %v964, 80
    %v1234 = vpop.permute.xlu0 %1233
    %v1236 = vsel %vm149, %v1232, 0
    %v1239 = vsel %vm149, %v1234, 0
    %1241 = vmatpush.bf16.xpose.msra.mxu0 0
    %1242 = vmatpush.bf16.xpose.msra.mxu0 0
    %1243 = vmatpush.bf16.xpose.msra.mxu0 0
    %1244 = vmatpush.bf16.xpose.msra.mxu0 0
    %1245 = vmatpush.bf16.xpose.msra.mxu0 0
    %1246 = vmatpush.bf16.xpose.msra.mxu0 0
    %1247 = vmatpush.bf16.xpose.msra.mxu0 0
    %1248 = vmatpush.bf16.xpose.msra.mxu0 %v1239
    %1249 = vmatmul.bf16.gmra.mxu0 %v1236
    %v1250 = vpop.f32.mrf.mxu0
    %v1251 = vadd.f32 %v85, %v1250
    %v1252 = vpop.f32.mrf.mxu0
    %1253 = vdwg.mxu0
    %v1254 = vsel %vm149, %v1228, -inf
    %1255 = vmax.xlane.f32.xlu0 %v1254
    %v1256 = vpop.xlane.xlu0 %1255
    %v1257 = vsel %vm149, %v1251, -inf
    %1258 = vmax.xlane.f32.xlu0 %v1257
    %v1259 = vpop.xlane.xlu0 %1258
    %v1260 = vsub.f32 %v1228, %v1256
    %v1261 = vsub.f32 %v1251, %v1259
    %v1262 = vmul.f32 %v1260, 1.442695
    %v1263 = vpow.pop %v1262
    %v1264 = vmul.f32 %v1261, 1.442695
    %v1265 = vpow.pop %v1264
    %v1266 = vsel %vm149, %v1263, 0.0
    %1267 = vadd.xlane.f32.xlu0 %v1266
    %v1268 = vpop.xlane.xlu0 %1267
    %v1269 = vsel %vm149, %v1265, 0.0
    %1270 = vadd.xlane.f32.xlu0 %v1269
    %v1271 = vpop.xlane.xlu0 %1270
    %v1272 = vrcp.pop %v1268
    %v1273 = vrcp.pop %v1271
    %v1274 = vmul.f32 %v1263, %v1272
    %v1275 = vmul.f32 %v1265, %v1273
    %v1276 = vpack.c.bf16 %v1274, %v1274
    %v1277 = vpack.c.bf16 %v1275, %v1275
    %1278 = vrot.lane.b32.xlu0 %v940, 48
    %v1279 = vpop.permute.xlu0 %1278
    %v1281 = vsel %vm149, %v1276, 0
    %v1284 = vsel %vm222, %v1279, 0
    %1286 = vmatpush.bf16.msra.mxu0 0
    %1287 = vmatpush.bf16.msra.mxu0 0
    %1288 = vmatpush.bf16.msra.mxu0 0
    %1289 = vmatpush.bf16.msra.mxu0 0
    %1290 = vmatpush.bf16.msra.mxu0 0
    %1291 = vmatpush.bf16.msra.mxu0 0
    %1292 = vmatpush.bf16.msra.mxu0 0
    %1293 = vmatpush.bf16.msra.mxu0 %v1284
    %1294 = vmatmul.bf16.gmra.mxu0 %v1281
    %v1295 = vpop.f32.mrf.mxu0
    %v1296 = vadd.f32 0.0, %v1295
    %v1297 = vpop.f32.mrf.mxu0
    %1298 = vdwg.mxu0
    %1299 = vrot.lane.b32.xlu0 %v964, 48
    %v1300 = vpop.permute.xlu0 %1299
    %v1302 = vsel %vm149, %v1277, 0
    %v1305 = vsel %vm222, %v1300, 0
    %1307 = vmatpush.bf16.msra.mxu0 0
    %1308 = vmatpush.bf16.msra.mxu0 0
    %1309 = vmatpush.bf16.msra.mxu0 0
    %1310 = vmatpush.bf16.msra.mxu0 0
    %1311 = vmatpush.bf16.msra.mxu0 0
    %1312 = vmatpush.bf16.msra.mxu0 0
    %1313 = vmatpush.bf16.msra.mxu0 0
    %1314 = vmatpush.bf16.msra.mxu0 %v1305
    %1315 = vmatmul.bf16.gmra.mxu0 %v1302
    %v1316 = vpop.f32.mrf.mxu0
    %v1317 = vadd.f32 0.0, %v1316
    %v1318 = vpop.f32.mrf.mxu0
    %1319 = vdwg.mxu0
    %v1320 = vld [vmem:[%s879 + $0x20] sm:$0xf]
    %v1321 = vpack.c.bf16 %v1317, %v1296
    %v1323 = vsel %vm149, %v1321, 0
    %v1326 = vsel %vm222, %v1320, 0
    %1328 = vmatpush.bf16.msra.mxu0 0
    %1329 = vmatpush.bf16.msra.mxu0 0
    %1330 = vmatpush.bf16.msra.mxu0 0
    %1331 = vmatpush.bf16.msra.mxu0 0
    %1332 = vmatpush.bf16.msra.mxu0 0
    %1333 = vmatpush.bf16.msra.mxu0 0
    %1334 = vmatpush.bf16.msra.mxu0 0
    %1335 = vmatpush.bf16.msra.mxu0 %v1326
    %1336 = vmatmul.bf16.gmra.mxu0 %v1323
    %v1337 = vpop.f32.mrf.mxu0
    %v1338 = vadd.f32 0.0, %v1337
    %v1339 = vpop.f32.mrf.mxu0
    %v1340 = vadd.f32 0.0, %v1339
    %1341 = vdwg.mxu0
    %v1342 = vadd.f32 %v1204, %v1338
    %v1343 = vadd.f32 %v1206, %v1340
    %1344 = vrot.lane.b32.xlu0 %v940, 104
    %v1345 = vpop.permute.xlu0 %1344
    %1346 = vrot.lane.b32.xlu0 %v940, 72
    %v1347 = vpop.permute.xlu0 %1346
    %v1349 = vsel %vm149, %v1345, 0
    %v1352 = vsel %vm149, %v1347, 0
    %1354 = vmatpush.bf16.xpose.msra.mxu0 0
    %1355 = vmatpush.bf16.xpose.msra.mxu0 0
    %1356 = vmatpush.bf16.xpose.msra.mxu0 0
    %1357 = vmatpush.bf16.xpose.msra.mxu0 0
    %1358 = vmatpush.bf16.xpose.msra.mxu0 0
    %1359 = vmatpush.bf16.xpose.msra.mxu0 0
    %1360 = vmatpush.bf16.xpose.msra.mxu0 0
    %1361 = vmatpush.bf16.xpose.msra.mxu0 %v1352
    %1362 = vmatmul.bf16.gmra.mxu0 %v1349
    %v1363 = vpop.f32.mrf.mxu0
    %v1364 = vadd.f32 %v84, %v1363
    %v1365 = vpop.f32.mrf.mxu0
    %1366 = vdwg.mxu0
    %1367 = vrot.lane.b32.xlu0 %v964, 104
    %v1368 = vpop.permute.xlu0 %1367
    %1369 = vrot.lane.b32.xlu0 %v964, 72
    %v1370 = vpop.permute.xlu0 %1369
    %v1372 = vsel %vm149, %v1368, 0
    %v1375 = vsel %vm149, %v1370, 0
    %1377 = vmatpush.bf16.xpose.msra.mxu0 0
    %1378 = vmatpush.bf16.xpose.msra.mxu0 0
    %1379 = vmatpush.bf16.xpose.msra.mxu0 0
    %1380 = vmatpush.bf16.xpose.msra.mxu0 0
    %1381 = vmatpush.bf16.xpose.msra.mxu0 0
    %1382 = vmatpush.bf16.xpose.msra.mxu0 0
    %1383 = vmatpush.bf16.xpose.msra.mxu0 0
    %1384 = vmatpush.bf16.xpose.msra.mxu0 %v1375
    %1385 = vmatmul.bf16.gmra.mxu0 %v1372
    %v1386 = vpop.f32.mrf.mxu0
    %v1387 = vadd.f32 %v85, %v1386
    %v1388 = vpop.f32.mrf.mxu0
    %1389 = vdwg.mxu0
    %v1390 = vsel %vm149, %v1364, -inf
    %1391 = vmax.xlane.f32.xlu0 %v1390
    %v1392 = vpop.xlane.xlu0 %1391
    %v1393 = vsel %vm149, %v1387, -inf
    %1394 = vmax.xlane.f32.xlu0 %v1393
    %v1395 = vpop.xlane.xlu0 %1394
    %v1396 = vsub.f32 %v1364, %v1392
    %v1397 = vsub.f32 %v1387, %v1395
    %v1398 = vmul.f32 %v1396, 1.442695
    %v1399 = vpow.pop %v1398
    %v1400 = vmul.f32 %v1397, 1.442695
    %v1401 = vpow.pop %v1400
    %v1402 = vsel %vm149, %v1399, 0.0
    %1403 = vadd.xlane.f32.xlu0 %v1402
    %v1404 = vpop.xlane.xlu0 %1403
    %v1405 = vsel %vm149, %v1401, 0.0
    %1406 = vadd.xlane.f32.xlu0 %v1405
    %v1407 = vpop.xlane.xlu0 %1406
    %v1408 = vrcp.pop %v1404
    %v1409 = vrcp.pop %v1407
    %v1410 = vmul.f32 %v1399, %v1408
    %v1411 = vmul.f32 %v1401, %v1409
    %v1412 = vpack.c.bf16 %v1410, %v1410
    %v1413 = vpack.c.bf16 %v1411, %v1411
    %1414 = vrot.lane.b32.xlu0 %v940, 40
    %v1415 = vpop.permute.xlu0 %1414
    %v1417 = vsel %vm149, %v1412, 0
    %v1420 = vsel %vm222, %v1415, 0
    %1422 = vmatpush.bf16.msra.mxu0 0
    %1423 = vmatpush.bf16.msra.mxu0 0
    %1424 = vmatpush.bf16.msra.mxu0 0
    %1425 = vmatpush.bf16.msra.mxu0 0
    %1426 = vmatpush.bf16.msra.mxu0 0
    %1427 = vmatpush.bf16.msra.mxu0 0
    %1428 = vmatpush.bf16.msra.mxu0 0
    %1429 = vmatpush.bf16.msra.mxu0 %v1420
    %1430 = vmatmul.bf16.gmra.mxu0 %v1417
    %v1431 = vpop.f32.mrf.mxu0
    %v1432 = vadd.f32 0.0, %v1431
    %v1433 = vpop.f32.mrf.mxu0
    %1434 = vdwg.mxu0
    %1435 = vrot.lane.b32.xlu0 %v964, 40
    %v1436 = vpop.permute.xlu0 %1435
    %v1438 = vsel %vm149, %v1413, 0
    %v1441 = vsel %vm222, %v1436, 0
    %1443 = vmatpush.bf16.msra.mxu0 0
    %1444 = vmatpush.bf16.msra.mxu0 0
    %1445 = vmatpush.bf16.msra.mxu0 0
    %1446 = vmatpush.bf16.msra.mxu0 0
    %1447 = vmatpush.bf16.msra.mxu0 0
    %1448 = vmatpush.bf16.msra.mxu0 0
    %1449 = vmatpush.bf16.msra.mxu0 0
    %1450 = vmatpush.bf16.msra.mxu0 %v1441
    %1451 = vmatmul.bf16.gmra.mxu0 %v1438
    %v1452 = vpop.f32.mrf.mxu0
    %v1453 = vadd.f32 0.0, %v1452
    %v1454 = vpop.f32.mrf.mxu0
    %1455 = vdwg.mxu0
    %v1456 = vld [vmem:[%s879 + $0x28] sm:$0xf]
    %v1457 = vpack.c.bf16 %v1453, %v1432
    %v1459 = vsel %vm149, %v1457, 0
    %v1462 = vsel %vm222, %v1456, 0
    %1464 = vmatpush.bf16.msra.mxu0 0
    %1465 = vmatpush.bf16.msra.mxu0 0
    %1466 = vmatpush.bf16.msra.mxu0 0
    %1467 = vmatpush.bf16.msra.mxu0 0
    %1468 = vmatpush.bf16.msra.mxu0 0
    %1469 = vmatpush.bf16.msra.mxu0 0
    %1470 = vmatpush.bf16.msra.mxu0 0
    %1471 = vmatpush.bf16.msra.mxu0 %v1462
    %1472 = vmatmul.bf16.gmra.mxu0 %v1459
    %v1473 = vpop.f32.mrf.mxu0
    %v1474 = vadd.f32 0.0, %v1473
    %v1475 = vpop.f32.mrf.mxu0
    %v1476 = vadd.f32 0.0, %v1475
    %1477 = vdwg.mxu0
    %v1478 = vadd.f32 %v1342, %v1474
    %v1479 = vadd.f32 %v1343, %v1476
    %v1480 = vadd.f32 %v877, %v1478
    %v1481 = vadd.f32 %v878, %v1479
    %v1482 = vperm.slane %v898, 0
    %v1483 = vadd.f32 %v1480, %v1482
    %v1484 = vadd.f32 %v1481, %v1482
    %v1485 = vsel %vm124, %v1483, 0.0
    %1486 = vadd.xlane.f32.xlu0 %v1485
    %v1487 = vpop.xlane.xlu0 %1486
    %v1488 = vsel %vm124, %v1484, 0.0
    %1489 = vadd.xlane.f32.xlu0 %v1488
    %v1490 = vpop.xlane.xlu0 %1489
    %v1491 = vmul.f32 %v1487, %v705
    %v1492 = vmul.f32 %v1490, %v705
    %v1493 = vsub.f32 %v1483, %v1491
    %v1494 = vsub.f32 %v1484, %v1492
    %v1495 = vmul.f32 %v1493, %v1493
    %v1496 = vmul.f32 %v1494, %v1494
    %v1497 = vsel %vm124, %v1495, 0.0
    %1498 = vadd.xlane.f32.xlu0 %v1497
    %v1499 = vpop.xlane.xlu0 %1498
    %v1500 = vsel %vm124, %v1496, 0.0
    %1501 = vadd.xlane.f32.xlu0 %v1500
    %v1502 = vpop.xlane.xlu0 %1501
    %v1503 = vmul.f32 %v1499, %v705
    %v1504 = vmul.f32 %v1502, %v705
    %v1505 = vadd.f32 %v1503, 1e-05
    %v1506 = vadd.f32 %v1504, 1e-05
    %v1507 = vrsqrt.pop %v1505
    %v1508 = vmul.f32 %v1507, %v1505
    %v1509 = vmul.f32 %v1508, %v1507
    %v1510 = vmul.f32 0.5, %v1509
    %v1511 = vsub.f32 1.5, %v1510
    %v1512 = vmul.f32 %v1507, %v1511
    %vm1513 = vweird.f32 %v1505
    %vm1514 = vweird.f32 %v1507
    %vm1515 = vmor %vm1513, %vm1514
    %v1516 = vsel %vm1515, %v1507, %v1512
    %v1517 = vrsqrt.pop %v1506
    %v1518 = vmul.f32 %v1517, %v1506
    %v1519 = vmul.f32 %v1518, %v1517
    %v1520 = vmul.f32 0.5, %v1519
    %v1521 = vsub.f32 1.5, %v1520
    %v1522 = vmul.f32 %v1517, %v1521
    %vm1523 = vweird.f32 %v1506
    %vm1524 = vweird.f32 %v1517
    %vm1525 = vmor %vm1523, %vm1524
    %v1526 = vsel %vm1525, %v1517, %v1522
    %v1527 = vmul.f32 %v1493, %v1516
    %v1528 = vmul.f32 %v1494, %v1526
    %v1529 = vperm.slane %v901, 0
    %v1530 = vmul.f32 %v1527, %v1529
    %v1531 = vmul.f32 %v1528, %v1529
    %v1532 = vperm.slane %v902, 0
    %v1533 = vadd.f32 %v1530, %v1532
    %v1534 = vadd.f32 %v1531, %v1532
    %v1535 = vpack.c.bf16 %v1534, %v1533
    %v1536 = vperm.slane %v899, 0
    %v1541 = vunpack.c.l.b16 %v884
    %v1542 = vunpack.c.l.b16 %v885
    %v1543 = vunpack.c.l.b16 %v886
    %v1544 = vunpack.c.l.b16 %v887
    %v1545 = vpack.c.b16 %v1542, %v1541
    %v1546 = vpack.c.b16 %v1544, %v1543
    %v1550 = vsel %vm124, %v1535, 0
    %1552 = vmatpush.bf16.msra.mxu0 0
    %1553 = vmatpush.bf16.msra.mxu0 0
    %1554 = vmatpush.bf16.msra.mxu0 0
    %1555 = vmatpush.bf16.msra.mxu0 0
    %1556 = vmatpush.bf16.msra.mxu0 0
    %1557 = vmatpush.bf16.msra.mxu0 0
    %1558 = vmatpush.bf16.msra.mxu0 %v1546
    %1559 = vmatpush.bf16.msra.mxu0 %v1545
    %1560 = vmatmul.bf16.gmra.mxu0 %v1550
    %v1561 = vpop.f32.mrf.mxu0
    %v1562 = vadd.f32 %v1536, %v1561
    %v1563 = vpop.f32.mrf.mxu0
    %v1564 = vadd.f32 %v1536, %v1563
    %1565 = vdwg.mxu0
    %v1566 = vmax.f32 %v1562, 0.0
    %v1567 = vmax.f32 %v1564, 0.0
    %v1568 = vpack.c.bf16 %v1567, %v1566
    %v1569 = vperm.slane %v900, 0
    %v1578 = vunpack.c.l.b16 %v888
    %v1579 = vunpack.c.l.b16 %v889
    %v1580 = vunpack.c.l.b16 %v890
    %v1581 = vunpack.c.l.b16 %v891
    %v1582 = vunpack.c.l.b16 %v892
    %v1583 = vunpack.c.l.b16 %v893
    %v1584 = vunpack.c.l.b16 %v894
    %v1585 = vunpack.c.l.b16 %v895
    %v1586 = vpack.c.b16 %v1579, %v1578
    %v1587 = vpack.c.b16 %v1581, %v1580
    %v1588 = vpack.c.b16 %v1583, %v1582
    %v1589 = vpack.c.b16 %v1585, %v1584
    %v1595 = vsel %vm809, %v1568, 0
    %1597 = vmatpush.bf16.msra.mxu0 0
    %1598 = vmatpush.bf16.msra.mxu0 0
    %1599 = vmatpush.bf16.msra.mxu0 0
    %1600 = vmatpush.bf16.msra.mxu0 0
    %1601 = vmatpush.bf16.msra.mxu0 %v1589
    %1602 = vmatpush.bf16.msra.mxu0 %v1588
    %1603 = vmatpush.bf16.msra.mxu0 %v1587
    %1604 = vmatpush.bf16.msra.mxu0 %v1586
    %1605 = vmatmul.bf16.gmra.mxu0 %v1595
    %v1606 = vpop.f32.mrf.mxu0
    %v1607 = vadd.f32 %v1569, %v1606
    %v1608 = vpop.f32.mrf.mxu0
    %v1609 = vadd.f32 %v1569, %v1608
    %1610 = vdwg.mxu0
    %v1611 = vadd.f32 %v1533, %v1607
    %v1612 = vadd.f32 %v1534, %v1609
    %v1613 = vsel %vm124, %v1611, 0.0
    %1614 = vadd.xlane.f32.xlu0 %v1613
    %v1615 = vpop.xlane.xlu0 %1614
    %v1616 = vsel %vm124, %v1612, 0.0
    %1617 = vadd.xlane.f32.xlu0 %v1616
    %v1618 = vpop.xlane.xlu0 %1617
    %v1619 = vmul.f32 %v1615, %v705
    %v1620 = vmul.f32 %v1618, %v705
    %v1621 = vsub.f32 %v1611, %v1619
    %v1622 = vsub.f32 %v1612, %v1620
    %v1623 = vmul.f32 %v1621, %v1621
    %v1624 = vmul.f32 %v1622, %v1622
    %v1625 = vsel %vm124, %v1623, 0.0
    %1626 = vadd.xlane.f32.xlu0 %v1625
    %v1627 = vpop.xlane.xlu0 %1626
    %v1628 = vsel %vm124, %v1624, 0.0
    %1629 = vadd.xlane.f32.xlu0 %v1628
    %v1630 = vpop.xlane.xlu0 %1629
    %v1631 = vmul.f32 %v1627, %v705
    %v1632 = vmul.f32 %v1630, %v705
    %v1633 = vadd.f32 %v1631, 1e-05
    %v1634 = vadd.f32 %v1632, 1e-05
    %v1635 = vrsqrt.pop %v1633
    %v1636 = vmul.f32 %v1635, %v1633
    %v1637 = vmul.f32 %v1636, %v1635
    %v1638 = vmul.f32 0.5, %v1637
    %v1639 = vsub.f32 1.5, %v1638
    %v1640 = vmul.f32 %v1635, %v1639
    %vm1641 = vweird.f32 %v1633
    %vm1642 = vweird.f32 %v1635
    %vm1643 = vmor %vm1641, %vm1642
    %v1644 = vsel %vm1643, %v1635, %v1640
    %v1645 = vrsqrt.pop %v1634
    %v1646 = vmul.f32 %v1645, %v1634
    %v1647 = vmul.f32 %v1646, %v1645
    %v1648 = vmul.f32 0.5, %v1647
    %v1649 = vsub.f32 1.5, %v1648
    %v1650 = vmul.f32 %v1645, %v1649
    %vm1651 = vweird.f32 %v1634
    %vm1652 = vweird.f32 %v1645
    %vm1653 = vmor %vm1651, %vm1652
    %v1654 = vsel %vm1653, %v1645, %v1650
    %v1655 = vmul.f32 %v1621, %v1644
    %v1656 = vmul.f32 %v1622, %v1654
    %v1657 = vperm.slane %v903, 0
    %v1658 = vmul.f32 %v1655, %v1657
    %v1659 = vmul.f32 %v1656, %v1657
    %v1660 = vperm.slane %v904, 0
    %v1661 = vadd.f32 %v1658, %v1660
    %v1662 = vadd.f32 %v1659, %v1660
    %1663 = vst.msk [vmem:[#allocation10] sm:$0xff] %vm124, %v1661
    %1664 = vst.msk [vmem:[#allocation10 + $0x8] sm:$0xff] %vm124, %v1662
    // Predicated region
    $region34: #{tpu_custom_call.1} parent=1 // pred_check
      _
    $region35: #{tpu_custom_call.1} parent=1 // pred_check_branch
      %1666 = sbr.rel (0) target = $region37
    $region36: #{tpu_custom_call.1} parent=1 // pred_region
      %1668 = vsyncadd [#allocation4], 0
      %s1669 = sshll.u32 [#allocation10], 4
      %s1670 = int_to_ptr.vmem [resolvable:$true] %s1669
      %s1671 = sshll.u32 %s4, 4
      %s1672 = int_to_ptr.hbm [resolvable:$true] %s1671
      %1677 = dma.vmem_to_hbm [thread:$0]  %s1670, 256, %s1672, [#allocation4], 128, 128, 8
    $region37: #{tpu_custom_call.1} parent=1 // pred_fallthru
      _
    // Predicated region
    $region38: #{tpu_custom_call.1} parent=1 // pred_check
      _
    $region39: #{tpu_custom_call.1} parent=1 // pred_check_branch
      %1679 = sbr.rel (0) target = $region41
    $region40: #{tpu_custom_call.1} parent=1 // pred_region
      %1681 = dma.done [#allocation4], 256
    $region41: #{tpu_custom_call.1} parent=1 // pred_fallthru
      _
    %1682 = vsyncpa [#allocation3], 1
    %1683 = vsyncpa [#allocation6], 1
    %1684 = vsyncpa [#allocation9], 1
    %1685 = vsyncpa [#allocation4], 1

</llo_original>
